<compile_context>
chip_gen: v6e
topology: v6e:2x2x1
jax: 0.10.0
libtpu: 0.0.40
codegen_flags: <defaults>
</compile_context>

<pallas_src>
import jax
import jax.numpy as jnp
from jax.experimental import pallas as pl
from jax.experimental.pallas import tpu as pltpu


# ----------------------------------------------------------------------------
# Pool pass: [avg | max | attn] over the sequence axis, gridded over batch tiles.
# ----------------------------------------------------------------------------
def _pool_kernel(x_ref, len_ref, w_ref, out_ref):
    x = x_ref[...]                                     # [bB, S, D] native dtype
    bB, S, D = x.shape

    # avg / max over seq include padded positions (torch.avg_pool1d / max_pool1d
    # applied to the raw tensor) — the mask is intentionally NOT applied here.
    avg_p = jnp.sum(x, axis=1, dtype=jnp.float32) * jnp.float32(1.0 / S)   # [bB, D]
    max_p = jnp.max(x, axis=1)                                             # [bB, D]

    # AttnPool logits: tanh(x) @ w on the MXU (f32 accumulation).
    t = jnp.tanh(x)                                    # EUP; stays bf16 on v6e/v7x
    w = w_ref[...]                                     # [D, 1], already in x dtype
    # (bB*S, D) @ (D, 1).  The flatten is a pure view when S is a multiple of the
    # sublane packing (8 for f32, 16 for bf16); otherwise a small copy.
    logits = jax.lax.dot_general(
        t.reshape(bB * S, D), w, (((1,), (0,)), ((), ())),
        preferred_element_type=jnp.float32,
    ).reshape(bB, S, 1)                                # S stays on sublanes

    # Mask rebuilt in-kernel from per-row valid lengths (no [B,S,1] mask traffic).
    lens = len_ref[...]                                # [bB, 1] int32
    pos = jax.lax.broadcasted_iota(jnp.int32, (bB, S, 1), 1)
    valid = pos < lens[:, :, None]                     # [bB, S, 1] bool

    neg_big = jnp.float32(-1e30)
    masked = jnp.where(valid, logits, neg_big)
    m = jnp.max(masked, axis=1, keepdims=True)         # [bB, 1, 1]
    e = jnp.exp(masked - m)                            # masked positions -> 0
    denom = jnp.sum(e, axis=1, keepdims=True)          # [bB, 1, 1]
    # Exact reciprocal (denominator is tiny); clamp guards all-padded rows.
    attn = e * (jnp.float32(1.0) / jnp.maximum(denom, jnp.float32(1e-30)))

    # Weighted sum over seq on the MXU: per batch row [1,S] @ [S,D] -> [1,D].
    attn_p = jax.lax.dot_general(
        attn.astype(x.dtype), x,
        (((1,), (1,)), ((0,), (0,))),
        preferred_element_type=jnp.float32)            # [bB, 1, D]

    # Dense sublane stores into the 2D [bB, 3D] output slab (no concat).
    out_ref[:, 0:D] = avg_p.astype(out_ref.dtype)
    out_ref[:, D:2 * D] = max_p.astype(out_ref.dtype)
    out_ref[:, 2 * D:3 * D] = attn_p[:, 0, :].astype(out_ref.dtype)


# ----------------------------------------------------------------------------
# FC epilogue: BN1d -> Linear -> ReLU -> BN1d -> (Dropout p=0) -> Linear.
# Tiny; runs whole-in-VMEM in a single call on the *unpadded* batch rows so the
# batch statistics are not contaminated by padding.
# ----------------------------------------------------------------------------
def _fc_kernel(x_ref, bn1_g_ref, bn1_b_ref, w1_ref, b1_ref,
               bn2_g_ref, bn2_b_ref, w2_ref, b2_ref, out_ref):
    eps = jnp.float32(1e-5)
    x = x_ref[...].astype(jnp.float32)                 # [B, 3D]

    # BatchNorm1d(3D), training-mode batch statistics (biased variance).
    mu1 = jnp.mean(x, axis=0, keepdims=True)
    var1 = jnp.mean((x - mu1) ** 2, axis=0, keepdims=True)
    xn = (x - mu1) * jax.lax.rsqrt(var1 + eps)
    xn = xn * bn1_g_ref[...] + bn1_b_ref[...]

    # Linear(3D -> linear_dim) + ReLU   (weights stored [in, out]).
    h = jnp.dot(xn, w1_ref[...], preferred_element_type=jnp.float32) + b1_ref[...]
    h = jnp.maximum(h, 0.0)

    # BatchNorm1d(linear_dim).
    mu2 = jnp.mean(h, axis=0, keepdims=True)
    var2 = jnp.mean((h - mu2) ** 2, axis=0, keepdims=True)
    hn = (h - mu2) * jax.lax.rsqrt(var2 + eps)
    hn = hn * bn2_g_ref[...] + bn2_b_ref[...]

    # Dropout(p=0.0) is identity. Final Linear(linear_dim -> out_dim).
    logits = jnp.dot(hn, w2_ref[...], preferred_element_type=jnp.float32) + b2_ref[...]
    out_ref[...] = logits.astype(out_ref.dtype)


# ----------------------------------------------------------------------------
# Tiling / VMEM budgeting (generation-aware, padding-aware).
# ----------------------------------------------------------------------------
def _round_up(x, m):
    return (x + m - 1) // m * m


def _vmem_config():
    """Returns (per-step tile budget bytes, vmem_limit_bytes) for this chip."""
    try:
        cap = int(pltpu.get_tpu_info().vmem_capacity_bytes)
    except Exception:
        cap = 64 * 1024 * 1024                       # conservative: v7x-sized VMEM
    if cap >= 100 * 1024 * 1024:                     # v5e / v6e: 128 MiB physical
        return 64 * 1024 * 1024, 100 * 1024 * 1024
    return 26 * 1024 * 1024, 44 * 1024 * 1024        # v7x: 64 MiB physical


def _choose_tiling(B, S, D, itemsize, budget):
    """Batch tile (multiple of 8) + padded batch so B_pad % bB == 0 and grid >= 2."""
    b8 = _round_up(max(B, 1), 8)
    sub = 8 * (4 // itemsize)                        # sublane pack: 8 f32 / 16 bf16
    d_pad = _round_up(D, 128)
    sd_in = _round_up(S, sub) * d_pad * itemsize     # one padded input slab / row
    sd_f32 = _round_up(S, 8) * d_pad * 4             # one padded f32 slab / row
    col_f32 = _round_up(S, 8) * 128 * 4              # one lane-padded [S,1] f32 / row
    per_row = (2 * sd_in                             # double-buffered x tile
               + sd_in                               # tanh(x) temporary
               + 2 * sd_f32                          # margin for compiler temporaries
               + 5 * col_f32                         # logits / masked / e / attn (+slack)
               + 2 * _round_up(3 * D, 128) * 4       # double-buffered output rows
               + 2 * 128 * 4 // 8)                   # lengths tile (amortized)
    max_b = max(8, (budget // per_row) // 8 * 8)
    bb = min(max_b, b8)
    # Keep >= 2 grid steps so the "parallel" batch axis can shard across the two
    # TensorCores of a v7x chip (negligible cost on single-TC v5e/v6e).
    if bb >= b8 and b8 >= 16:
        bb = _round_up(b8 // 2, 8)
    b_pad = _round_up(b8, bb)
    return bb, b_pad


# ----------------------------------------------------------------------------
# Wrapper.
# ----------------------------------------------------------------------------
def exclusive_unit_forward(encoded_seq, seq_mask, params):
    B, S, D = encoded_seq.shape
    out_dim = params["fc2_w"].shape[1]
    x_dtype = encoded_seq.dtype
    itemsize = jnp.dtype(x_dtype).itemsize

    tile_budget, vmem_limit = _vmem_config()
    bB, B_pad = _choose_tiling(B, S, D, itemsize, tile_budget)
    grid = (B_pad // bB,)

    # Per-row valid lengths (prefix-contiguous mask assumption).
    lens = jnp.sum(seq_mask.astype(jnp.int32), axis=-1).reshape(B, 1)

    if B_pad > B:   # pad batch (zeros, length 0) so every tile is full & bB % 8 == 0
        encoded_seq = jnp.pad(encoded_seq, ((0, B_pad - B), (0, 0), (0, 0)))
        lens = jnp.pad(lens, ((0, B_pad - B), (0, 0)))

    attn_w = params["attn_w"].reshape(D, 1).astype(x_dtype)   # pre-cast once

    cost = pl.CostEstimate(
        flops=int(6 * B_pad * S * D),
        transcendentals=int(B_pad * S * (D + 1)),
        bytes_accessed=int(B_pad * S * D * itemsize + B_pad * 4 + B_pad * 3 * D * 4),
    )

    pooled = pl.pallas_call(
        _pool_kernel,
        out_shape=jax.ShapeDtypeStruct((B_pad, 3 * D), jnp.float32),
        grid=grid,
        in_specs=[
            pl.BlockSpec((bB, S, D), lambda i: (i, 0, 0)),
            pl.BlockSpec((bB, 1), lambda i: (i, 0)),
            pl.BlockSpec((D, 1), lambda i: (0, 0)),
        ],
        out_specs=pl.BlockSpec((bB, 3 * D), lambda i: (i, 0)),
        compiler_params=pltpu.CompilerParams(
            dimension_semantics=("parallel",),
            vmem_limit_bytes=vmem_limit,
        ),
        cost_estimate=cost,
    )(encoded_seq, lens, attn_w)

    # Drop padded rows before the FC so they never enter the BatchNorm statistics.
    pooled = pooled[:B]

    vmem = pl.BlockSpec(memory_space=pltpu.MemorySpace.VMEM)
    logits = pl.pallas_call(
        _fc_kernel,
        out_shape=jax.ShapeDtypeStruct((B, out_dim), jnp.float32),
        in_specs=[vmem] * 9,
        out_specs=vmem,
        compiler_params=pltpu.CompilerParams(vmem_limit_bytes=vmem_limit),
    )(pooled,
      params["bn1_g"], params["bn1_b"], params["fc1_w"], params["fc1_b"],
      params["bn2_g"], params["bn2_b"], params["fc2_w"], params["fc2_b"])

    # label=None branch of the PyTorch module: (logits, None, None)
    return logits, None, None


def init_params(key, input_dim, linear_dim, out_dim):
    """Deterministic synthetic parameter init (shapes match the PyTorch module)."""
    k = jax.random.split(key, 4)
    f32 = jnp.float32
    return {
        # AttnPool._weight_vector (PyTorch inits to zeros; use small randoms so
        # the attention path is non-trivial). AttnPool._bias is unused in forward.
        "attn_w": 0.1 * jax.random.normal(k[0], (input_dim,), f32),
        # fc[0]: BatchNorm1d(3*input_dim) — default gamma=1, beta=0
        "bn1_g": jnp.ones((1, 3 * input_dim), f32),
        "bn1_b": jnp.zeros((1, 3 * input_dim), f32),
        # fc[1]: Linear(3*input_dim, linear_dim) — stored transposed [in, out]
        "fc1_w": 0.05 * jax.random.normal(k[1], (3 * input_dim, linear_dim), f32),
        "fc1_b": 0.05 * jax.random.normal(k[2], (1, linear_dim), f32),
        # fc[3]: BatchNorm1d(linear_dim)
        "bn2_g": jnp.ones((1, linear_dim), f32),
        "bn2_b": jnp.zeros((1, linear_dim), f32),
        # fc[5]: Linear(linear_dim, out_dim)
        "fc2_w": 0.05 * jax.random.normal(k[3], (linear_dim, out_dim), f32),
        "fc2_b": jnp.zeros((1, out_dim), f32),
    }


if __name__ == "__main__":
    B, S, D = 2, 8, 32          # batch, seq_len, input_dim
    LINEAR_DIM, OUT_DIM = 64, 4

    key = jax.random.PRNGKey(0)
    k_x, k_p = jax.random.split(key)

    encoded_seq = jax.random.normal(k_x, (B, S, D), jnp.float32)
    # seq_mask: 1 = valid token, 0 = padding (second example has 3 padded positions)
    seq_mask = jnp.array(
        [[1, 1, 1, 1, 1, 1, 1, 1],
         [1, 1, 1, 1, 1, 0, 0, 0]], dtype=jnp.float32)

    params = init_params(k_p, D, LINEAR_DIM, OUT_DIM)

    logits, loss, f1 = exclusive_unit_forward(encoded_seq, seq_mask, params)
    jax.block_until_ready(logits)
    assert logits.shape == (B, OUT_DIM)
    assert bool(jnp.all(jnp.isfinite(logits)))
    assert loss is None and f1 is None
    print("KERNEL_OK")
</pallas_src>

<mosaic_0001>
module attributes {stable_mosaic.version = 11 : i64} {
  func.func @_pool_kernel(%arg0: i32, %arg1: memref<8x8x32xf32, #tpu.memory_space<vmem>>, %arg2: memref<8x1xi32, #tpu.memory_space<vmem>>, %arg3: memref<32x1xf32, #tpu.memory_space<vmem>>, %arg4: memref<8x96xf32, #tpu.memory_space<vmem>>) attributes {dimension_semantics = [#tpu.dimension_semantics<parallel>], iteration_bounds = array<i64: 1>, scalar_prefetch = 0 : i64, scratch_operands = 0 : i64, tpu.core_type = #tpu.core_type<tc>, window_params = [{transform_indices = @transform_0, window_bounds = array<i64: 8, 8, 32>}, {transform_indices = @transform_1, window_bounds = array<i64: 8, 1>}, {pipeline_mode = #tpu.pipeline_mode<synchronous>, transform_indices = @transform_2, window_bounds = array<i64: 32, 1>}, {transform_indices = @transform_3, window_bounds = array<i64: 8, 96>}]} {
    %c0 = arith.constant 0 : index
    %c0_0 = arith.constant 0 : index
    %c0_1 = arith.constant 0 : index
    %0 = vector.load %arg1[%c0, %c0_0, %c0_1] : memref<8x8x32xf32, #tpu.memory_space<vmem>>, vector<8x8x32xf32>
    %cst = arith.constant dense<0.000000e+00> : vector<8x32xf32>
    %1 = vector.multi_reduction <add>, %0, %cst [1] : vector<8x8x32xf32> to vector<8x32xf32>
    %cst_2 = arith.constant 1.250000e-01 : f32
    %2 = vector.broadcast %cst_2 : f32 to vector<8x32xf32>
    %3 = arith.mulf %1, %2 : vector<8x32xf32>
    %cst_3 = arith.constant dense<0xFF800000> : vector<8x32xf32>
    %4 = vector.multi_reduction <maximumf>, %0, %cst_3 [1] : vector<8x8x32xf32> to vector<8x32xf32>
    %5 = math.tanh %0 : vector<8x8x32xf32>
    %c0_4 = arith.constant 0 : index
    %c0_5 = arith.constant 0 : index
    %6 = vector.load %arg3[%c0_4, %c0_5] : memref<32x1xf32, #tpu.memory_space<vmem>>, vector<32x1xf32>
    %7 = vector.shape_cast %5 : vector<8x8x32xf32> to vector<64x32xf32>
    %cst_6 = arith.constant dense<0.000000e+00> : vector<64x1xf32>
    %8 = tpu.matmul %7, %6, %cst_6 {dimension_numbers = #tpu.dot_dimension_numbers<[1], [0], [0], [1], [0, 0, 1, 1], [], []>} : vector<64x32xf32>, vector<32x1xf32>, vector<64x1xf32> -> vector<64x1xf32>
    %9 = vector.shape_cast %8 : vector<64x1xf32> to vector<8x8x1xf32>
    %c0_7 = arith.constant 0 : index
    %c0_8 = arith.constant 0 : index
    %10 = vector.load %arg2[%c0_7, %c0_8] : memref<8x1xi32, #tpu.memory_space<vmem>>, vector<8x1xi32>
    %11 = tpu.iota {dimensions = array<i32: 1>} : vector<8x8x1xi32>
    %12 = vector.shape_cast %10 : vector<8x1xi32> to vector<8x1x1xi32>
    %13 = vector.broadcast %12 : vector<8x1x1xi32> to vector<8x8x1xi32>
    %14 = arith.cmpi slt, %11, %13 : vector<8x8x1xi32>
    %cst_9 = arith.constant -1.000000e+30 : f32
    %15 = vector.broadcast %cst_9 : f32 to vector<8x8x1xf32>
    %16 = arith.select %14, %9, %15 : vector<8x8x1xi1>, vector<8x8x1xf32>
    %cst_10 = arith.constant dense<0xFF800000> : vector<8x1xf32>
    %17 = vector.multi_reduction <maximumf>, %16, %cst_10 [1] : vector<8x8x1xf32> to vector<8x1xf32>
    %18 = vector.shape_cast %17 : vector<8x1xf32> to vector<8x1x1xf32>
    %19 = vector.broadcast %18 : vector<8x1x1xf32> to vector<8x8x1xf32>
    %20 = arith.subf %16, %19 : vector<8x8x1xf32>
    %21 = math.exp %20 : vector<8x8x1xf32>
    %cst_11 = arith.constant dense<0.000000e+00> : vector<8x1xf32>
    %22 = vector.multi_reduction <add>, %21, %cst_11 [1] : vector<8x8x1xf32> to vector<8x1xf32>
    %23 = vector.shape_cast %22 : vector<8x1xf32> to vector<8x1x1xf32>
    %cst_12 = arith.constant 1.000000e-30 : f32
    %24 = vector.broadcast %cst_12 : f32 to vector<8x1x1xf32>
    %25 = arith.maximumf %23, %24 : vector<8x1x1xf32>
    %cst_13 = arith.constant 1.000000e+00 : f32
    %26 = vector.broadcast %cst_13 : f32 to vector<8x1x1xf32>
    %27 = arith.divf %26, %25 : vector<8x1x1xf32>
    %28 = vector.broadcast %27 : vector<8x1x1xf32> to vector<8x8x1xf32>
    %29 = arith.mulf %21, %28 : vector<8x8x1xf32>
    %cst_14 = arith.constant dense<0.000000e+00> : vector<8x1x32xf32>
    %30 = tpu.matmul %29, %0, %cst_14 {dimension_numbers = #tpu.dot_dimension_numbers<[1], [1], [2], [2], [0, 0, 0, 2, 1, 2], [0], [0]>} : vector<8x8x1xf32>, vector<8x8x32xf32>, vector<8x1x32xf32> -> vector<8x1x32xf32>
    %c0_15 = arith.constant 0 : index
    %c0_16 = arith.constant 0 : index
    %31 = vector.load %arg4[%c0_15, %c0_16] : memref<8x96xf32, #tpu.memory_space<vmem>>, vector<8x32xf32>
    tpu.vector_store %arg4[%c0_15, %c0_16], %3 {strides = array<i32>} : memref<8x96xf32, #tpu.memory_space<vmem>>, vector<8x32xf32>,
    %c0_17 = arith.constant 0 : index
    %c32 = arith.constant 32 : index
    %32 = vector.load %arg4[%c0_17, %c32] : memref<8x96xf32, #tpu.memory_space<vmem>>, vector<8x32xf32>
    tpu.vector_store %arg4[%c0_17, %c32], %4 {strides = array<i32>} : memref<8x96xf32, #tpu.memory_space<vmem>>, vector<8x32xf32>,
    %33 = vector.shape_cast %30 : vector<8x1x32xf32> to vector<8x32xf32>
    %c0_18 = arith.constant 0 : index
    %c64 = arith.constant 64 : index
    %34 = vector.load %arg4[%c0_18, %c64] : memref<8x96xf32, #tpu.memory_space<vmem>>, vector<8x32xf32>
    tpu.vector_store %arg4[%c0_18, %c64], %33 {strides = array<i32>} : memref<8x96xf32, #tpu.memory_space<vmem>>, vector<8x32xf32>,
    return
  }
  func.func @transform_0(%arg0: i32) -> (i32, i32, i32) {
    %c0_i32 = arith.constant 0 : i32
    %c0_i32_0 = arith.constant 0 : i32
    %c0_i32_1 = arith.constant 0 : i32
    return %arg0, %c0_i32, %c0_i32_0 : i32, i32, i32
  }
  func.func @transform_1(%arg0: i32) -> (i32, i32) {
    %c0_i32 = arith.constant 0 : i32
    %c0_i32_0 = arith.constant 0 : i32
    return %arg0, %c0_i32 : i32, i32
  }
  func.func @transform_2(%arg0: i32) -> (i32, i32) {
    %c0_i32 = arith.constant 0 : i32
    %c0_i32_0 = arith.constant 0 : i32
    %c0_i32_1 = arith.constant 0 : i32
    return %c0_i32, %c0_i32_0 : i32, i32
  }
  func.func @transform_3(%arg0: i32) -> (i32, i32) {
    %c0_i32 = arith.constant 0 : i32
    %c0_i32_0 = arith.constant 0 : i32
    return %arg0, %c0_i32 : i32, i32
  }
}

</mosaic_0001>

<llo_original>
// kernel: tpu_custom_call.1
$region0: #{tpu_custom_call.1}
  #allocation0 [shape = 'u32[]', space=smem, size = 0x4, offset = 0x4, fixed_abs, tag = 'smem constant byte address 0x4 - core index']
  #allocation1 [shape = 'u32[144,128]{1,0:T(1,128)}', space=vmem, size = 0x12000, scoped, tag = 'internal scratch']
  %s0 = inlined_call_operand.hbm [shape: f32[8,8,32], index: 0, kind: input, shape index: {}]
  %s1 = inlined_call_operand.vmem [shape: s32[8,1], index: 1, kind: input, shape index: {}]
  %s2 = inlined_call_operand.vmem [shape: f32[32,1], index: 2, kind: input, shape index: {}]
  %s3 = inlined_call_operand.hbm [shape: f32[8,96], index: 3, kind: output, shape index: {}]
  %s4 = sld [smem:[#allocation0]]
  $region26: #{tpu_custom_call.1} parent=0
    _
  %s6 = ssub.s32 1, %s4
  %s7 = scalar_select 0, %s6, %s4
  $region1: #{tpu_custom_call.1} parent=0
    #allocation2 [shape = 'u8[32768]{0}', space=vmem, size = 0x8000, scoped, tag = 'input window, operand 0, single buffered']
    #allocation3 [shape = 's32[1]{0}', space=sflag, size = 0x4, scoped, tag = 'scoped memory for tpu_custom_call.1']
    #allocation4 [shape = 's32[1]{0}', space=sflag, size = 0x4, scoped, tag = 'scoped memory for tpu_custom_call.1']
    #allocation5 [shape = 'u8[4096]{0}', space=vmem, size = 0x1000, scoped, tag = 'output window, operand 0, single buffered']
    %8 = vsyncpa [#allocation3], 0
    %9 = vsyncpa [#allocation4], 0
    // Predicated region
    $region2: #{tpu_custom_call.1} parent=1 // pred_check
      _
    $region3: #{tpu_custom_call.1} parent=1 // pred_check_branch
      %11 = sbr.rel (0) target = $region5
    $region4: #{tpu_custom_call.1} parent=1 // pred_region
      %s13 = ssub.s32 1024, 1024
      %14 = vsyncadd [#allocation3], %s13
      %s15 = sshll.u32 [#allocation2], 4
      %s16 = int_to_ptr.vmem [resolvable:$true] %s15
      %21 = dma.hbm_to_vmem [thread:$0]  %s0, 1024, %s16, [#allocation3], 128, 128, 8
    $region5: #{tpu_custom_call.1} parent=1 // pred_fallthru
      _
    // Predicated region
    $region6: #{tpu_custom_call.1} parent=1 // pred_check
      _
    $region7: #{tpu_custom_call.1} parent=1 // pred_check_branch
      %23 = sbr.rel (0) target = $region9
    $region8: #{tpu_custom_call.1} parent=1 // pred_region
      _
    $region9: #{tpu_custom_call.1} parent=1 // pred_fallthru
      _
    // Predicated region
    $region10: #{tpu_custom_call.1} parent=1 // pred_check
      _
    $region11: #{tpu_custom_call.1} parent=1 // pred_check_branch
      %25 = sbr.rel (0) target = $region13
    $region12: #{tpu_custom_call.1} parent=1 // pred_region
      _
    $region13: #{tpu_custom_call.1} parent=1 // pred_fallthru
      _
    // Predicated region
    $region14: #{tpu_custom_call.1} parent=1 // pred_check
      _
    $region15: #{tpu_custom_call.1} parent=1 // pred_check_branch
      %27 = sbr.rel (0) target = $region17
    $region16: #{tpu_custom_call.1} parent=1 // pred_region
      %28 = dma.done [#allocation3], 1024
    $region17: #{tpu_custom_call.1} parent=1 // pred_fallthru
      _
    %v29 = vld [vmem:[#allocation2] sm:$0xff]
    %v30 = vld [vmem:[#allocation2 + $0x8] sm:$0xff]
    %v31 = vld [vmem:[#allocation2 + $0x10] sm:$0xff]
    %v32 = vld [vmem:[#allocation2 + $0x18] sm:$0xff]
    %v33 = vld [vmem:[#allocation2 + $0x20] sm:$0xff]
    %v34 = vld [vmem:[#allocation2 + $0x28] sm:$0xff]
    %v35 = vld [vmem:[#allocation2 + $0x30] sm:$0xff]
    %v36 = vld [vmem:[#allocation2 + $0x38] sm:$0xff]
    %vm37 = vcmask 261120
    %v38 = vsel %vm37, %v29, 0.0
    %v39 = vrot.slane %v38, 4
    %v40 = vadd.f32 %v38, %v39
    %v41 = vrot.slane %v40, 2
    %v42 = vadd.f32 %v40, %v41
    %v43 = vrot.slane %v42, 1
    %v44 = vadd.f32 %v42, %v43
    %v45 = vsel %vm37, %v30, 0.0
    %v46 = vrot.slane %v45, 4
    %v47 = vadd.f32 %v45, %v46
    %v48 = vrot.slane %v47, 2
    %v49 = vadd.f32 %v47, %v48
    %v50 = vrot.slane %v49, 1
    %v51 = vadd.f32 %v49, %v50
    %v52 = vsel %vm37, %v31, 0.0
    %v53 = vrot.slane %v52, 4
    %v54 = vadd.f32 %v52, %v53
    %v55 = vrot.slane %v54, 2
    %v56 = vadd.f32 %v54, %v55
    %v57 = vrot.slane %v56, 1
    %v58 = vadd.f32 %v56, %v57
    %v59 = vsel %vm37, %v32, 0.0
    %v60 = vrot.slane %v59, 4
    %v61 = vadd.f32 %v59, %v60
    %v62 = vrot.slane %v61, 2
    %v63 = vadd.f32 %v61, %v62
    %v64 = vrot.slane %v63, 1
    %v65 = vadd.f32 %v63, %v64
    %v66 = vsel %vm37, %v33, 0.0
    %v67 = vrot.slane %v66, 4
    %v68 = vadd.f32 %v66, %v67
    %v69 = vrot.slane %v68, 2
    %v70 = vadd.f32 %v68, %v69
    %v71 = vrot.slane %v70, 1
    %v72 = vadd.f32 %v70, %v71
    %v73 = vsel %vm37, %v34, 0.0
    %v74 = vrot.slane %v73, 4
    %v75 = vadd.f32 %v73, %v74
    %v76 = vrot.slane %v75, 2
    %v77 = vadd.f32 %v75, %v76
    %v78 = vrot.slane %v77, 1
    %v79 = vadd.f32 %v77, %v78
    %v80 = vsel %vm37, %v35, 0.0
    %v81 = vrot.slane %v80, 4
    %v82 = vadd.f32 %v80, %v81
    %v83 = vrot.slane %v82, 2
    %v84 = vadd.f32 %v82, %v83
    %v85 = vrot.slane %v84, 1
    %v86 = vadd.f32 %v84, %v85
    %v87 = vsel %vm37, %v36, 0.0
    %v88 = vrot.slane %v87, 4
    %v89 = vadd.f32 %v87, %v88
    %v90 = vrot.slane %v89, 2
    %v91 = vadd.f32 %v89, %v90
    %v92 = vrot.slane %v91, 1
    %v93 = vadd.f32 %v91, %v92
    %v94 = vmul.f32 %v44, 0.125
    %v95 = vmul.f32 %v51, 0.125
    %v96 = vmul.f32 %v58, 0.125
    %v97 = vmul.f32 %v65, 0.125
    %v98 = vmul.f32 %v72, 0.125
    %v99 = vmul.f32 %v79, 0.125
    %v100 = vmul.f32 %v86, 0.125
    %v101 = vmul.f32 %v93, 0.125
    %v102 = vsel %vm37, %v29, -inf
    %v103 = vrot.slane %v102, 4
    %v104 = vmax.f32 %v102, %v103
    %v105 = vrot.slane %v104, 2
    %v106 = vmax.f32 %v104, %v105
    %v107 = vrot.slane %v106, 1
    %v108 = vmax.f32 %v106, %v107
    %v109 = vsel %vm37, %v30, -inf
    %v110 = vrot.slane %v109, 4
    %v111 = vmax.f32 %v109, %v110
    %v112 = vrot.slane %v111, 2
    %v113 = vmax.f32 %v111, %v112
    %v114 = vrot.slane %v113, 1
    %v115 = vmax.f32 %v113, %v114
    %v116 = vsel %vm37, %v31, -inf
    %v117 = vrot.slane %v116, 4
    %v118 = vmax.f32 %v116, %v117
    %v119 = vrot.slane %v118, 2
    %v120 = vmax.f32 %v118, %v119
    %v121 = vrot.slane %v120, 1
    %v122 = vmax.f32 %v120, %v121
    %v123 = vsel %vm37, %v32, -inf
    %v124 = vrot.slane %v123, 4
    %v125 = vmax.f32 %v123, %v124
    %v126 = vrot.slane %v125, 2
    %v127 = vmax.f32 %v125, %v126
    %v128 = vrot.slane %v127, 1
    %v129 = vmax.f32 %v127, %v128
    %v130 = vsel %vm37, %v33, -inf
    %v131 = vrot.slane %v130, 4
    %v132 = vmax.f32 %v130, %v131
    %v133 = vrot.slane %v132, 2
    %v134 = vmax.f32 %v132, %v133
    %v135 = vrot.slane %v134, 1
    %v136 = vmax.f32 %v134, %v135
    %v137 = vsel %vm37, %v34, -inf
    %v138 = vrot.slane %v137, 4
    %v139 = vmax.f32 %v137, %v138
    %v140 = vrot.slane %v139, 2
    %v141 = vmax.f32 %v139, %v140
    %v142 = vrot.slane %v141, 1
    %v143 = vmax.f32 %v141, %v142
    %v144 = vsel %vm37, %v35, -inf
    %v145 = vrot.slane %v144, 4
    %v146 = vmax.f32 %v144, %v145
    %v147 = vrot.slane %v146, 2
    %v148 = vmax.f32 %v146, %v147
    %v149 = vrot.slane %v148, 1
    %v150 = vmax.f32 %v148, %v149
    %v151 = vsel %vm37, %v36, -inf
    %v152 = vrot.slane %v151, 4
    %v153 = vmax.f32 %v151, %v152
    %v154 = vrot.slane %v153, 2
    %v155 = vmax.f32 %v153, %v154
    %v156 = vrot.slane %v155, 1
    %v157 = vmax.f32 %v155, %v156
    %v158 = vtanh.pop %v29
    %v159 = vtanh.pop %v30
    %v160 = vtanh.pop %v31
    %v161 = vtanh.pop %v32
    %v162 = vtanh.pop %v33
    %v163 = vtanh.pop %v34
    %v164 = vtanh.pop %v35
    %v165 = vtanh.pop %v36
    %v166 = vld [vmem:[%s2] sm:$0xff]
    %v167 = vld [vmem:[%s2 + $0x8] sm:$0xff]
    %v168 = vld [vmem:[%s2 + $0x10] sm:$0xff]
    %v169 = vld [vmem:[%s2 + $0x18] sm:$0xff]
    %v171 = vsel %vm37, %v158, 0
    %v174 = vsel %vm37, %v159, 0
    %v177 = vsel %vm37, %v160, 0
    %v180 = vsel %vm37, %v161, 0
    %v183 = vsel %vm37, %v162, 0
    %v186 = vsel %vm37, %v163, 0
    %v189 = vsel %vm37, %v164, 0
    %v192 = vsel %vm37, %v165, 0
    %194 = vmatprep.subr.mxu0 0.0
    %195 = vmatpush1.msra.mxu0 0.0
    %196 = vmatprep.subr.mxu0 0.0
    %197 = vmatpush1.msra.mxu0 0.0
    %198 = vmatprep.subr.mxu0 0.0
    %199 = vmatpush1.msra.mxu0 0.0
    %200 = vmatprep.subr.mxu0 0.0
    %201 = vmatpush1.msra.mxu0 0.0
    %202 = vmatprep.subr.mxu0 0.0
    %203 = vmatpush1.msra.mxu0 0.0
    %204 = vmatprep.subr.mxu0 0.0
    %205 = vmatpush1.msra.mxu0 0.0
    %206 = vmatprep.subr.mxu0 0.0
    %207 = vmatpush1.msra.mxu0 0.0
    %208 = vmatprep.subr.mxu0 0.0
    %209 = vmatpush1.msra.mxu0 0.0
    %210 = vmatprep.subr.mxu0 0.0
    %211 = vmatpush1.msra.mxu0 0.0
    %212 = vmatprep.subr.mxu0 0.0
    %213 = vmatpush1.msra.mxu0 0.0
    %214 = vmatprep.subr.mxu0 0.0
    %215 = vmatpush1.msra.mxu0 0.0
    %216 = vmatprep.subr.mxu0 0.0
    %217 = vmatpush1.msra.mxu0 0.0
    %218 = vmatprep.subr.mxu0 0.0
    %219 = vmatpush1.msra.mxu0 %v169
    %220 = vmatprep.subr.mxu0 0.0
    %221 = vmatpush1.msra.mxu0 %v168
    %222 = vmatprep.subr.mxu0 0.0
    %223 = vmatpush1.msra.mxu0 %v167
    %224 = vmatprep.subr.mxu0 0.0
    %225 = vmatpush1.msra.mxu0 %v166
    %226 = vmatprep.subr.mxu0 0.0
    %227 = vmatpush2.msra.mxu0 0.0
    %228 = vmatprep.subr.mxu0 0.0
    %229 = vmatpush2.msra.mxu0 0.0
    %230 = vmatprep.subr.mxu0 0.0
    %231 = vmatpush2.msra.mxu0 0.0
    %232 = vmatprep.subr.mxu0 0.0
    %233 = vmatpush2.msra.mxu0 0.0
    %234 = vmatprep.subr.mxu0 0.0
    %235 = vmatpush2.msra.mxu0 0.0
    %236 = vmatprep.subr.mxu0 0.0
    %237 = vmatpush2.msra.mxu0 0.0
    %238 = vmatprep.subr.mxu0 0.0
    %239 = vmatpush2.msra.mxu0 0.0
    %240 = vmatprep.subr.mxu0 0.0
    %241 = vmatpush2.msra.mxu0 0.0
    %242 = vmatprep.subr.mxu0 0.0
    %243 = vmatpush2.msra.mxu0 0.0
    %244 = vmatprep.subr.mxu0 0.0
    %245 = vmatpush2.msra.mxu0 0.0
    %246 = vmatprep.subr.mxu0 0.0
    %247 = vmatpush2.msra.mxu0 0.0
    %248 = vmatprep.subr.mxu0 0.0
    %249 = vmatpush2.msra.mxu0 0.0
    %250 = vmatprep.subr.mxu0 0.0
    %251 = vmatpush2.msra.mxu0 0.0
    %252 = vmatprep.subr.mxu0 0.0
    %253 = vmatpush2.msra.mxu0 0.0
    %254 = vmatprep.subr.mxu0 0.0
    %255 = vmatpush2.msra.mxu0 0.0
    %256 = vmatprep.subr.mxu0 0.0
    %257 = vmatpush2.msra.mxu0 0.0
    %258 = vmatprep.mubr.f32.mxu0 0.0
    %259 = vmatmul.mubr.f32.gmra.mxu0 %v171
    %v260 = vpop.f32.mrf.mxu0
    %v261 = vadd.f32 0.0, %v260
    %v262 = vpop.f32.mrf.mxu0
    %263 = vmatprep.mubr.f32.mxu0 0.0
    %264 = vmatmul.mubr.f32.gmra.mxu0 %v174
    %v265 = vpop.f32.mrf.mxu0
    %v266 = vadd.f32 0.0, %v265
    %v267 = vpop.f32.mrf.mxu0
    %268 = vmatprep.mubr.f32.mxu0 0.0
    %269 = vmatmul.mubr.f32.gmra.mxu0 %v177
    %v270 = vpop.f32.mrf.mxu0
    %v271 = vadd.f32 0.0, %v270
    %v272 = vpop.f32.mrf.mxu0
    %273 = vmatprep.mubr.f32.mxu0 0.0
    %274 = vmatmul.mubr.f32.gmra.mxu0 %v180
    %v275 = vpop.f32.mrf.mxu0
    %v276 = vadd.f32 0.0, %v275
    %v277 = vpop.f32.mrf.mxu0
    %278 = vmatprep.mubr.f32.mxu0 0.0
    %279 = vmatmul.mubr.f32.gmra.mxu0 %v183
    %v280 = vpop.f32.mrf.mxu0
    %v281 = vadd.f32 0.0, %v280
    %v282 = vpop.f32.mrf.mxu0
    %283 = vmatprep.mubr.f32.mxu0 0.0
    %284 = vmatmul.mubr.f32.gmra.mxu0 %v186
    %v285 = vpop.f32.mrf.mxu0
    %v286 = vadd.f32 0.0, %v285
    %v287 = vpop.f32.mrf.mxu0
    %288 = vmatprep.mubr.f32.mxu0 0.0
    %289 = vmatmul.mubr.f32.gmra.mxu0 %v189
    %v290 = vpop.f32.mrf.mxu0
    %v291 = vadd.f32 0.0, %v290
    %v292 = vpop.f32.mrf.mxu0
    %293 = vmatprep.mubr.f32.mxu0 0.0
    %294 = vmatmul.mubr.f32.gmra.mxu0 %v192
    %v295 = vpop.f32.mrf.mxu0
    %v296 = vadd.f32 0.0, %v295
    %v297 = vpop.f32.mrf.mxu0
    %298 = vdwg.mxu0
    %v299 = vld [vmem:[%s1] sm:$0xff]
    %v300 = vlaneseq
    %v301 = vshrl.u32 %v300, 7
    %v302 = vcombine.high %v299, %v299
    %v304 = vunpack.c.l.s4 1966171168
    %v305 = vunpack.c.0.s8 %v304
    %v306 = vlaneseq
    %v307 = vshrl.u32 %v306, 7
    %v308 = vsub.s32 %v305, %v307
    %v309 = vrot.slane %v299, %v308
    %v311 = vunpack.c.l.s4 1966171168
    %v312 = vunpack.c.0.s8 %v311
    %v313 = vlaneseq
    %v314 = vshrl.u32 %v313, 7
    %v315 = vsub.s32 %v312, %v314
    %v316 = vrot.slane %v302, %v315
    %v317 = vcombine.high %v309, %v309
    %v318 = vcombine.high %v316, %v316
    %v320 = vunpack.c.l.s4 1966171168
    %v321 = vunpack.c.0.s8 %v320
    %v322 = vlaneseq
    %v323 = vshrl.u32 %v322, 7
    %v324 = vsub.s32 %v321, %v323
    %v325 = vrot.slane %v309, %v324
    %v327 = vunpack.c.l.s4 1966171168
    %v328 = vunpack.c.0.s8 %v327
    %v329 = vlaneseq
    %v330 = vshrl.u32 %v329, 7
    %v331 = vsub.s32 %v328, %v330
    %v332 = vrot.slane %v316, %v331
    %v334 = vunpack.c.l.s4 1966171168
    %v335 = vunpack.c.0.s8 %v334
    %v336 = vlaneseq
    %v337 = vshrl.u32 %v336, 7
    %v338 = vsub.s32 %v335, %v337
    %v339 = vrot.slane %v317, %v338
    %v341 = vunpack.c.l.s4 1966171168
    %v342 = vunpack.c.0.s8 %v341
    %v343 = vlaneseq
    %v344 = vshrl.u32 %v343, 7
    %v345 = vsub.s32 %v342, %v344
    %v346 = vrot.slane %v318, %v345
    %v347 = vcombine.high %v325, %v325
    %v348 = vcombine.high %v332, %v332
    %v349 = vcombine.high %v339, %v339
    %v350 = vcombine.high %v346, %v346
    %v351 = vlaneseq
    %v352 = vshrl.u32 %v351, 7
    %v353 = vsub.s32 0, %v352
    %v354 = vrot.slane %v325, %v353
    %v355 = vlaneseq
    %v356 = vshrl.u32 %v355, 7
    %v357 = vsub.s32 0, %v356
    %v358 = vrot.slane %v339, %v357
    %v359 = vlaneseq
    %v360 = vshrl.u32 %v359, 7
    %v361 = vsub.s32 0, %v360
    %v362 = vrot.slane %v347, %v361
    %v363 = vlaneseq
    %v364 = vshrl.u32 %v363, 7
    %v365 = vsub.s32 0, %v364
    %v366 = vrot.slane %v349, %v365
    %v367 = vlaneseq
    %v368 = vshrl.u32 %v367, 7
    %v369 = vsub.s32 0, %v368
    %v370 = vrot.slane %v332, %v369
    %v371 = vlaneseq
    %v372 = vshrl.u32 %v371, 7
    %v373 = vsub.s32 0, %v372
    %v374 = vrot.slane %v346, %v373
    %v375 = vlaneseq
    %v376 = vshrl.u32 %v375, 7
    %v377 = vsub.s32 0, %v376
    %v378 = vrot.slane %v348, %v377
    %v379 = vlaneseq
    %v380 = vshrl.u32 %v379, 7
    %v381 = vsub.s32 0, %v380
    %v382 = vrot.slane %v350, %v381
    %vm383 = vcmp.lt.s32.totalorder %v301, %v354
    %vm384 = vcmp.lt.s32.totalorder %v301, %v358
    %vm385 = vcmp.lt.s32.totalorder %v301, %v362
    %vm386 = vcmp.lt.s32.totalorder %v301, %v366
    %vm387 = vcmp.lt.s32.totalorder %v301, %v370
    %vm388 = vcmp.lt.s32.totalorder %v301, %v374
    %vm389 = vcmp.lt.s32.totalorder %v301, %v378
    %vm390 = vcmp.lt.s32.totalorder %v301, %v382
    %v391 = vsel %vm383, %v261, -1e+30
    %v392 = vsel %vm384, %v266, -1e+30
    %v393 = vsel %vm385, %v271, -1e+30
    %v394 = vsel %vm386, %v276, -1e+30
    %v395 = vsel %vm387, %v281, -1e+30
    %v396 = vsel %vm388, %v286, -1e+30
    %v397 = vsel %vm389, %v291, -1e+30
    %v398 = vsel %vm390, %v296, -1e+30
    %vm399 = vcmask 7168
    %v400 = vsel %vm399, %v391, -inf
    %v401 = vrot.slane %v400, 4
    %v402 = vmax.f32 %v400, %v401
    %v403 = vrot.slane %v402, 2
    %v404 = vmax.f32 %v402, %v403
    %v405 = vrot.slane %v404, 1
    %v406 = vmax.f32 %v404, %v405
    %v407 = vsel %vm399, %v392, -inf
    %v408 = vrot.slane %v407, 4
    %v409 = vmax.f32 %v407, %v408
    %v410 = vrot.slane %v409, 2
    %v411 = vmax.f32 %v409, %v410
    %v412 = vrot.slane %v411, 1
    %v413 = vmax.f32 %v411, %v412
    %v414 = vsel %vm399, %v393, -inf
    %v415 = vrot.slane %v414, 4
    %v416 = vmax.f32 %v414, %v415
    %v417 = vrot.slane %v416, 2
    %v418 = vmax.f32 %v416, %v417
    %v419 = vrot.slane %v418, 1
    %v420 = vmax.f32 %v418, %v419
    %v421 = vsel %vm399, %v394, -inf
    %v422 = vrot.slane %v421, 4
    %v423 = vmax.f32 %v421, %v422
    %v424 = vrot.slane %v423, 2
    %v425 = vmax.f32 %v423, %v424
    %v426 = vrot.slane %v425, 1
    %v427 = vmax.f32 %v425, %v426
    %v428 = vsel %vm399, %v395, -inf
    %v429 = vrot.slane %v428, 4
    %v430 = vmax.f32 %v428, %v429
    %v431 = vrot.slane %v430, 2
    %v432 = vmax.f32 %v430, %v431
    %v433 = vrot.slane %v432, 1
    %v434 = vmax.f32 %v432, %v433
    %v435 = vsel %vm399, %v396, -inf
    %v436 = vrot.slane %v435, 4
    %v437 = vmax.f32 %v435, %v436
    %v438 = vrot.slane %v437, 2
    %v439 = vmax.f32 %v437, %v438
    %v440 = vrot.slane %v439, 1
    %v441 = vmax.f32 %v439, %v440
    %v442 = vsel %vm399, %v397, -inf
    %v443 = vrot.slane %v442, 4
    %v444 = vmax.f32 %v442, %v443
    %v445 = vrot.slane %v444, 2
    %v446 = vmax.f32 %v444, %v445
    %v447 = vrot.slane %v446, 1
    %v448 = vmax.f32 %v446, %v447
    %v449 = vsel %vm399, %v398, -inf
    %v450 = vrot.slane %v449, 4
    %v451 = vmax.f32 %v449, %v450
    %v452 = vrot.slane %v451, 2
    %v453 = vmax.f32 %v451, %v452
    %v454 = vrot.slane %v453, 1
    %v455 = vmax.f32 %v453, %v454
    %v456 = vsub.f32 %v391, %v406
    %v457 = vsub.f32 %v392, %v413
    %v458 = vsub.f32 %v393, %v420
    %v459 = vsub.f32 %v394, %v427
    %v460 = vsub.f32 %v395, %v434
    %v461 = vsub.f32 %v396, %v441
    %v462 = vsub.f32 %v397, %v448
    %v463 = vsub.f32 %v398, %v455
    %v464 = vmul.f32 %v456, 1.442695
    %v465 = vpow.pop %v464
    %v466 = vmul.f32 %v457, 1.442695
    %v467 = vpow.pop %v466
    %v468 = vmul.f32 %v458, 1.442695
    %v469 = vpow.pop %v468
    %v470 = vmul.f32 %v459, 1.442695
    %v471 = vpow.pop %v470
    %v472 = vmul.f32 %v460, 1.442695
    %v473 = vpow.pop %v472
    %v474 = vmul.f32 %v461, 1.442695
    %v475 = vpow.pop %v474
    %v476 = vmul.f32 %v462, 1.442695
    %v477 = vpow.pop %v476
    %v478 = vmul.f32 %v463, 1.442695
    %v479 = vpow.pop %v478
    %v480 = vsel %vm399, %v465, 0.0
    %v481 = vrot.slane %v480, 4
    %v482 = vadd.f32 %v480, %v481
    %v483 = vrot.slane %v482, 2
    %v484 = vadd.f32 %v482, %v483
    %v485 = vrot.slane %v484, 1
    %v486 = vadd.f32 %v484, %v485
    %v487 = vsel %vm399, %v467, 0.0
    %v488 = vrot.slane %v487, 4
    %v489 = vadd.f32 %v487, %v488
    %v490 = vrot.slane %v489, 2
    %v491 = vadd.f32 %v489, %v490
    %v492 = vrot.slane %v491, 1
    %v493 = vadd.f32 %v491, %v492
    %v494 = vsel %vm399, %v469, 0.0
    %v495 = vrot.slane %v494, 4
    %v496 = vadd.f32 %v494, %v495
    %v497 = vrot.slane %v496, 2
    %v498 = vadd.f32 %v496, %v497
    %v499 = vrot.slane %v498, 1
    %v500 = vadd.f32 %v498, %v499
    %v501 = vsel %vm399, %v471, 0.0
    %v502 = vrot.slane %v501, 4
    %v503 = vadd.f32 %v501, %v502
    %v504 = vrot.slane %v503, 2
    %v505 = vadd.f32 %v503, %v504
    %v506 = vrot.slane %v505, 1
    %v507 = vadd.f32 %v505, %v506
    %v508 = vsel %vm399, %v473, 0.0
    %v509 = vrot.slane %v508, 4
    %v510 = vadd.f32 %v508, %v509
    %v511 = vrot.slane %v510, 2
    %v512 = vadd.f32 %v510, %v511
    %v513 = vrot.slane %v512, 1
    %v514 = vadd.f32 %v512, %v513
    %v515 = vsel %vm399, %v475, 0.0
    %v516 = vrot.slane %v515, 4
    %v517 = vadd.f32 %v515, %v516
    %v518 = vrot.slane %v517, 2
    %v519 = vadd.f32 %v517, %v518
    %v520 = vrot.slane %v519, 1
    %v521 = vadd.f32 %v519, %v520
    %v522 = vsel %vm399, %v477, 0.0
    %v523 = vrot.slane %v522, 4
    %v524 = vadd.f32 %v522, %v523
    %v525 = vrot.slane %v524, 2
    %v526 = vadd.f32 %v524, %v525
    %v527 = vrot.slane %v526, 1
    %v528 = vadd.f32 %v526, %v527
    %v529 = vsel %vm399, %v479, 0.0
    %v530 = vrot.slane %v529, 4
    %v531 = vadd.f32 %v529, %v530
    %v532 = vrot.slane %v531, 2
    %v533 = vadd.f32 %v531, %v532
    %v534 = vrot.slane %v533, 1
    %v535 = vadd.f32 %v533, %v534
    %v536 = vmax.f32 %v486, 1e-30
    %v537 = vmax.f32 %v493, 1e-30
    %v538 = vmax.f32 %v500, 1e-30
    %v539 = vmax.f32 %v507, 1e-30
    %v540 = vmax.f32 %v514, 1e-30
    %v541 = vmax.f32 %v521, 1e-30
    %v542 = vmax.f32 %v528, 1e-30
    %v543 = vmax.f32 %v535, 1e-30
    %v544 = vrcp.pop %v536
    %v545 = vmul.f32 1.0, %v544
    %v546 = vrcp.pop %v537
    %v547 = vmul.f32 1.0, %v546
    %v548 = vrcp.pop %v538
    %v549 = vmul.f32 1.0, %v548
    %v550 = vrcp.pop %v539
    %v551 = vmul.f32 1.0, %v550
    %v552 = vrcp.pop %v540
    %v553 = vmul.f32 1.0, %v552
    %v554 = vrcp.pop %v541
    %v555 = vmul.f32 1.0, %v554
    %v556 = vrcp.pop %v542
    %v557 = vmul.f32 1.0, %v556
    %v558 = vrcp.pop %v543
    %v559 = vmul.f32 1.0, %v558
    %v560 = vmul.f32 %v465, %v545
    %v561 = vmul.f32 %v467, %v547
    %v562 = vmul.f32 %v469, %v549
    %v563 = vmul.f32 %v471, %v551
    %v564 = vmul.f32 %v473, %v553
    %v565 = vmul.f32 %v475, %v555
    %v566 = vmul.f32 %v477, %v557
    %v567 = vmul.f32 %v479, %v559
    %568 = vxpose.xlu0.b32.start [1/16] %v560, 128
    %569 = vxpose.xlu0.b32.cont [2/16] 0.0, 128
    %570 = vxpose.xlu0.b32.cont [3/16] 0.0, 128
    %571 = vxpose.xlu0.b32.cont [4/16] 0.0, 128
    %572 = vxpose.xlu0.b32.cont [5/16] 0.0, 128
    %573 = vxpose.xlu0.b32.cont [6/16] 0.0, 128
    %574 = vxpose.xlu0.b32.cont [7/16] 0.0, 128
    %575 = vxpose.xlu0.b32.cont [8/16] 0.0, 128
    %576 = vxpose.xlu0.b32.cont [9/16] 0.0, 128
    %577 = vxpose.xlu0.b32.cont [10/16] 0.0, 128
    %578 = vxpose.xlu0.b32.cont [11/16] 0.0, 128
    %579 = vxpose.xlu0.b32.cont [12/16] 0.0, 128
    %580 = vxpose.xlu0.b32.cont [13/16] 0.0, 128
    %581 = vxpose.xlu0.b32.cont [14/16] 0.0, 128
    %582 = vxpose.xlu0.b32.cont [15/16] 0.0, 128
    %583 = vxpose.xlu0.b32.end [16/16] 0.0, 128
    %v584 = vpop.trf.xlu0
    %v585 = vpop.trf.xlu0
    %v586 = vpop.trf.xlu0
    %v587 = vpop.trf.xlu0
    %v588 = vpop.trf.xlu0
    %v589 = vpop.trf.xlu0
    %v590 = vpop.trf.xlu0
    %v591 = vpop.trf.xlu0
    %v592 = vpop.trf.xlu0
    %v593 = vpop.trf.xlu0
    %v594 = vpop.trf.xlu0
    %v595 = vpop.trf.xlu0
    %v596 = vpop.trf.xlu0
    %v597 = vpop.trf.xlu0
    %v598 = vpop.trf.xlu0
    %v599 = vpop.trf.xlu0
    %vm600 = vcmask 64512
    %v602 = vsel %vm600, %v584, 0
    %604 = vmatprep.subr.mxu0 0.0
    %605 = vmatpush1.msra.mxu0 0.0
    %606 = vmatprep.subr.mxu0 0.0
    %607 = vmatpush1.msra.mxu0 0.0
    %608 = vmatprep.subr.mxu0 0.0
    %609 = vmatpush1.msra.mxu0 0.0
    %610 = vmatprep.subr.mxu0 0.0
    %611 = vmatpush1.msra.mxu0 0.0
    %612 = vmatprep.subr.mxu0 0.0
    %613 = vmatpush1.msra.mxu0 0.0
    %614 = vmatprep.subr.mxu0 0.0
    %615 = vmatpush1.msra.mxu0 0.0
    %616 = vmatprep.subr.mxu0 0.0
    %617 = vmatpush1.msra.mxu0 0.0
    %618 = vmatprep.subr.mxu0 0.0
    %619 = vmatpush1.msra.mxu0 0.0
    %620 = vmatprep.subr.mxu0 0.0
    %621 = vmatpush1.msra.mxu0 0.0
    %622 = vmatprep.subr.mxu0 0.0
    %623 = vmatpush1.msra.mxu0 0.0
    %624 = vmatprep.subr.mxu0 0.0
    %625 = vmatpush1.msra.mxu0 0.0
    %626 = vmatprep.subr.mxu0 0.0
    %627 = vmatpush1.msra.mxu0 0.0
    %628 = vmatprep.subr.mxu0 0.0
    %629 = vmatpush1.msra.mxu0 0.0
    %630 = vmatprep.subr.mxu0 0.0
    %631 = vmatpush1.msra.mxu0 0.0
    %632 = vmatprep.subr.mxu0 0.0
    %633 = vmatpush1.msra.mxu0 0.0
    %634 = vmatprep.subr.mxu0 0.0
    %635 = vmatpush1.msra.mxu0 %v29
    %636 = vmatprep.subr.mxu0 0.0
    %637 = vmatpush2.msra.mxu0 0.0
    %638 = vmatprep.subr.mxu0 0.0
    %639 = vmatpush2.msra.mxu0 0.0
    %640 = vmatprep.subr.mxu0 0.0
    %641 = vmatpush2.msra.mxu0 0.0
    %642 = vmatprep.subr.mxu0 0.0
    %643 = vmatpush2.msra.mxu0 0.0
    %644 = vmatprep.subr.mxu0 0.0
    %645 = vmatpush2.msra.mxu0 0.0
    %646 = vmatprep.subr.mxu0 0.0
    %647 = vmatpush2.msra.mxu0 0.0
    %648 = vmatprep.subr.mxu0 0.0
    %649 = vmatpush2.msra.mxu0 0.0
    %650 = vmatprep.subr.mxu0 0.0
    %651 = vmatpush2.msra.mxu0 0.0
    %652 = vmatprep.subr.mxu0 0.0
    %653 = vmatpush2.msra.mxu0 0.0
    %654 = vmatprep.subr.mxu0 0.0
    %655 = vmatpush2.msra.mxu0 0.0
    %656 = vmatprep.subr.mxu0 0.0
    %657 = vmatpush2.msra.mxu0 0.0
    %658 = vmatprep.subr.mxu0 0.0
    %659 = vmatpush2.msra.mxu0 0.0
    %660 = vmatprep.subr.mxu0 0.0
    %661 = vmatpush2.msra.mxu0 0.0
    %662 = vmatprep.subr.mxu0 0.0
    %663 = vmatpush2.msra.mxu0 0.0
    %664 = vmatprep.subr.mxu0 0.0
    %665 = vmatpush2.msra.mxu0 0.0
    %666 = vmatprep.subr.mxu0 0.0
    %667 = vmatpush2.msra.mxu0 0.0
    %668 = vmatprep.mubr.f32.mxu0 0.0
    %669 = vmatmul.mubr.f32.gmra.mxu0 %v602
    %v670 = vpop.f32.mrf.mxu0
    %v671 = vadd.f32 0.0, %v670
    %v672 = vpop.f32.mrf.mxu0
    %673 = vdwg.mxu0
    %674 = vxpose.xlu0.b32.start [1/16] %v561, 128
    %675 = vxpose.xlu0.b32.cont [2/16] 0.0, 128
    %676 = vxpose.xlu0.b32.cont [3/16] 0.0, 128
    %677 = vxpose.xlu0.b32.cont [4/16] 0.0, 128
    %678 = vxpose.xlu0.b32.cont [5/16] 0.0, 128
    %679 = vxpose.xlu0.b32.cont [6/16] 0.0, 128
    %680 = vxpose.xlu0.b32.cont [7/16] 0.0, 128
    %681 = vxpose.xlu0.b32.cont [8/16] 0.0, 128
    %682 = vxpose.xlu0.b32.cont [9/16] 0.0, 128
    %683 = vxpose.xlu0.b32.cont [10/16] 0.0, 128
    %684 = vxpose.xlu0.b32.cont [11/16] 0.0, 128
    %685 = vxpose.xlu0.b32.cont [12/16] 0.0, 128
    %686 = vxpose.xlu0.b32.cont [13/16] 0.0, 128
    %687 = vxpose.xlu0.b32.cont [14/16] 0.0, 128
    %688 = vxpose.xlu0.b32.cont [15/16] 0.0, 128
    %689 = vxpose.xlu0.b32.end [16/16] 0.0, 128
    %v690 = vpop.trf.xlu0
    %v691 = vpop.trf.xlu0
    %v692 = vpop.trf.xlu0
    %v693 = vpop.trf.xlu0
    %v694 = vpop.trf.xlu0
    %v695 = vpop.trf.xlu0
    %v696 = vpop.trf.xlu0
    %v697 = vpop.trf.xlu0
    %v698 = vpop.trf.xlu0
    %v699 = vpop.trf.xlu0
    %v700 = vpop.trf.xlu0
    %v701 = vpop.trf.xlu0
    %v702 = vpop.trf.xlu0
    %v703 = vpop.trf.xlu0
    %v704 = vpop.trf.xlu0
    %v705 = vpop.trf.xlu0
    %v707 = vsel %vm600, %v690, 0
    %709 = vmatprep.subr.mxu0 0.0
    %710 = vmatpush1.msra.mxu0 0.0
    %711 = vmatprep.subr.mxu0 0.0
    %712 = vmatpush1.msra.mxu0 0.0
    %713 = vmatprep.subr.mxu0 0.0
    %714 = vmatpush1.msra.mxu0 0.0
    %715 = vmatprep.subr.mxu0 0.0
    %716 = vmatpush1.msra.mxu0 0.0
    %717 = vmatprep.subr.mxu0 0.0
    %718 = vmatpush1.msra.mxu0 0.0
    %719 = vmatprep.subr.mxu0 0.0
    %720 = vmatpush1.msra.mxu0 0.0
    %721 = vmatprep.subr.mxu0 0.0
    %722 = vmatpush1.msra.mxu0 0.0
    %723 = vmatprep.subr.mxu0 0.0
    %724 = vmatpush1.msra.mxu0 0.0
    %725 = vmatprep.subr.mxu0 0.0
    %726 = vmatpush1.msra.mxu0 0.0
    %727 = vmatprep.subr.mxu0 0.0
    %728 = vmatpush1.msra.mxu0 0.0
    %729 = vmatprep.subr.mxu0 0.0
    %730 = vmatpush1.msra.mxu0 0.0
    %731 = vmatprep.subr.mxu0 0.0
    %732 = vmatpush1.msra.mxu0 0.0
    %733 = vmatprep.subr.mxu0 0.0
    %734 = vmatpush1.msra.mxu0 0.0
    %735 = vmatprep.subr.mxu0 0.0
    %736 = vmatpush1.msra.mxu0 0.0
    %737 = vmatprep.subr.mxu0 0.0
    %738 = vmatpush1.msra.mxu0 0.0
    %739 = vmatprep.subr.mxu0 0.0
    %740 = vmatpush1.msra.mxu0 %v30
    %741 = vmatprep.subr.mxu0 0.0
    %742 = vmatpush2.msra.mxu0 0.0
    %743 = vmatprep.subr.mxu0 0.0
    %744 = vmatpush2.msra.mxu0 0.0
    %745 = vmatprep.subr.mxu0 0.0
    %746 = vmatpush2.msra.mxu0 0.0
    %747 = vmatprep.subr.mxu0 0.0
    %748 = vmatpush2.msra.mxu0 0.0
    %749 = vmatprep.subr.mxu0 0.0
    %750 = vmatpush2.msra.mxu0 0.0
    %751 = vmatprep.subr.mxu0 0.0
    %752 = vmatpush2.msra.mxu0 0.0
    %753 = vmatprep.subr.mxu0 0.0
    %754 = vmatpush2.msra.mxu0 0.0
    %755 = vmatprep.subr.mxu0 0.0
    %756 = vmatpush2.msra.mxu0 0.0
    %757 = vmatprep.subr.mxu0 0.0
    %758 = vmatpush2.msra.mxu0 0.0
    %759 = vmatprep.subr.mxu0 0.0
    %760 = vmatpush2.msra.mxu0 0.0
    %761 = vmatprep.subr.mxu0 0.0
    %762 = vmatpush2.msra.mxu0 0.0
    %763 = vmatprep.subr.mxu0 0.0
    %764 = vmatpush2.msra.mxu0 0.0
    %765 = vmatprep.subr.mxu0 0.0
    %766 = vmatpush2.msra.mxu0 0.0
    %767 = vmatprep.subr.mxu0 0.0
    %768 = vmatpush2.msra.mxu0 0.0
    %769 = vmatprep.subr.mxu0 0.0
    %770 = vmatpush2.msra.mxu0 0.0
    %771 = vmatprep.subr.mxu0 0.0
    %772 = vmatpush2.msra.mxu0 0.0
    %773 = vmatprep.mubr.f32.mxu0 0.0
    %774 = vmatmul.mubr.f32.gmra.mxu0 %v707
    %v775 = vpop.f32.mrf.mxu0
    %v776 = vadd.f32 0.0, %v775
    %v777 = vpop.f32.mrf.mxu0
    %778 = vdwg.mxu0
    %779 = vxpose.xlu0.b32.start [1/16] %v562, 128
    %780 = vxpose.xlu0.b32.cont [2/16] 0.0, 128
    %781 = vxpose.xlu0.b32.cont [3/16] 0.0, 128
    %782 = vxpose.xlu0.b32.cont [4/16] 0.0, 128
    %783 = vxpose.xlu0.b32.cont [5/16] 0.0, 128
    %784 = vxpose.xlu0.b32.cont [6/16] 0.0, 128
    %785 = vxpose.xlu0.b32.cont [7/16] 0.0, 128
    %786 = vxpose.xlu0.b32.cont [8/16] 0.0, 128
    %787 = vxpose.xlu0.b32.cont [9/16] 0.0, 128
    %788 = vxpose.xlu0.b32.cont [10/16] 0.0, 128
    %789 = vxpose.xlu0.b32.cont [11/16] 0.0, 128
    %790 = vxpose.xlu0.b32.cont [12/16] 0.0, 128
    %791 = vxpose.xlu0.b32.cont [13/16] 0.0, 128
    %792 = vxpose.xlu0.b32.cont [14/16] 0.0, 128
    %793 = vxpose.xlu0.b32.cont [15/16] 0.0, 128
    %794 = vxpose.xlu0.b32.end [16/16] 0.0, 128
    %v795 = vpop.trf.xlu0
    %v796 = vpop.trf.xlu0
    %v797 = vpop.trf.xlu0
    %v798 = vpop.trf.xlu0
    %v799 = vpop.trf.xlu0
    %v800 = vpop.trf.xlu0
    %v801 = vpop.trf.xlu0
    %v802 = vpop.trf.xlu0
    %v803 = vpop.trf.xlu0
    %v804 = vpop.trf.xlu0
    %v805 = vpop.trf.xlu0
    %v806 = vpop.trf.xlu0
    %v807 = vpop.trf.xlu0
    %v808 = vpop.trf.xlu0
    %v809 = vpop.trf.xlu0
    %v810 = vpop.trf.xlu0
    %v812 = vsel %vm600, %v795, 0
    %814 = vmatprep.subr.mxu0 0.0
    %815 = vmatpush1.msra.mxu0 0.0
    %816 = vmatprep.subr.mxu0 0.0
    %817 = vmatpush1.msra.mxu0 0.0
    %818 = vmatprep.subr.mxu0 0.0
    %819 = vmatpush1.msra.mxu0 0.0
    %820 = vmatprep.subr.mxu0 0.0
    %821 = vmatpush1.msra.mxu0 0.0
    %822 = vmatprep.subr.mxu0 0.0
    %823 = vmatpush1.msra.mxu0 0.0
    %824 = vmatprep.subr.mxu0 0.0
    %825 = vmatpush1.msra.mxu0 0.0
    %826 = vmatprep.subr.mxu0 0.0
    %827 = vmatpush1.msra.mxu0 0.0
    %828 = vmatprep.subr.mxu0 0.0
    %829 = vmatpush1.msra.mxu0 0.0
    %830 = vmatprep.subr.mxu0 0.0
    %831 = vmatpush1.msra.mxu0 0.0
    %832 = vmatprep.subr.mxu0 0.0
    %833 = vmatpush1.msra.mxu0 0.0
    %834 = vmatprep.subr.mxu0 0.0
    %835 = vmatpush1.msra.mxu0 0.0
    %836 = vmatprep.subr.mxu0 0.0
    %837 = vmatpush1.msra.mxu0 0.0
    %838 = vmatprep.subr.mxu0 0.0
    %839 = vmatpush1.msra.mxu0 0.0
    %840 = vmatprep.subr.mxu0 0.0
    %841 = vmatpush1.msra.mxu0 0.0
    %842 = vmatprep.subr.mxu0 0.0
    %843 = vmatpush1.msra.mxu0 0.0
    %844 = vmatprep.subr.mxu0 0.0
    %845 = vmatpush1.msra.mxu0 %v31
    %846 = vmatprep.subr.mxu0 0.0
    %847 = vmatpush2.msra.mxu0 0.0
    %848 = vmatprep.subr.mxu0 0.0
    %849 = vmatpush2.msra.mxu0 0.0
    %850 = vmatprep.subr.mxu0 0.0
    %851 = vmatpush2.msra.mxu0 0.0
    %852 = vmatprep.subr.mxu0 0.0
    %853 = vmatpush2.msra.mxu0 0.0
    %854 = vmatprep.subr.mxu0 0.0
    %855 = vmatpush2.msra.mxu0 0.0
    %856 = vmatprep.subr.mxu0 0.0
    %857 = vmatpush2.msra.mxu0 0.0
    %858 = vmatprep.subr.mxu0 0.0
    %859 = vmatpush2.msra.mxu0 0.0
    %860 = vmatprep.subr.mxu0 0.0
    %861 = vmatpush2.msra.mxu0 0.0
    %862 = vmatprep.subr.mxu0 0.0
    %863 = vmatpush2.msra.mxu0 0.0
    %864 = vmatprep.subr.mxu0 0.0
    %865 = vmatpush2.msra.mxu0 0.0
    %866 = vmatprep.subr.mxu0 0.0
    %867 = vmatpush2.msra.mxu0 0.0
    %868 = vmatprep.subr.mxu0 0.0
    %869 = vmatpush2.msra.mxu0 0.0
    %870 = vmatprep.subr.mxu0 0.0
    %871 = vmatpush2.msra.mxu0 0.0
    %872 = vmatprep.subr.mxu0 0.0
    %873 = vmatpush2.msra.mxu0 0.0
    %874 = vmatprep.subr.mxu0 0.0
    %875 = vmatpush2.msra.mxu0 0.0
    %876 = vmatprep.subr.mxu0 0.0
    %877 = vmatpush2.msra.mxu0 0.0
    %878 = vmatprep.mubr.f32.mxu0 0.0
    %879 = vmatmul.mubr.f32.gmra.mxu0 %v812
    %v880 = vpop.f32.mrf.mxu0
    %v881 = vadd.f32 0.0, %v880
    %v882 = vpop.f32.mrf.mxu0
    %883 = vdwg.mxu0
    %884 = vxpose.xlu0.b32.start [1/16] %v563, 128
    %885 = vxpose.xlu0.b32.cont [2/16] 0.0, 128
    %886 = vxpose.xlu0.b32.cont [3/16] 0.0, 128
    %887 = vxpose.xlu0.b32.cont [4/16] 0.0, 128
    %888 = vxpose.xlu0.b32.cont [5/16] 0.0, 128
    %889 = vxpose.xlu0.b32.cont [6/16] 0.0, 128
    %890 = vxpose.xlu0.b32.cont [7/16] 0.0, 128
    %891 = vxpose.xlu0.b32.cont [8/16] 0.0, 128
    %892 = vxpose.xlu0.b32.cont [9/16] 0.0, 128
    %893 = vxpose.xlu0.b32.cont [10/16] 0.0, 128
    %894 = vxpose.xlu0.b32.cont [11/16] 0.0, 128
    %895 = vxpose.xlu0.b32.cont [12/16] 0.0, 128
    %896 = vxpose.xlu0.b32.cont [13/16] 0.0, 128
    %897 = vxpose.xlu0.b32.cont [14/16] 0.0, 128
    %898 = vxpose.xlu0.b32.cont [15/16] 0.0, 128
    %899 = vxpose.xlu0.b32.end [16/16] 0.0, 128
    %v900 = vpop.trf.xlu0
    %v901 = vpop.trf.xlu0
    %v902 = vpop.trf.xlu0
    %v903 = vpop.trf.xlu0
    %v904 = vpop.trf.xlu0
    %v905 = vpop.trf.xlu0
    %v906 = vpop.trf.xlu0
    %v907 = vpop.trf.xlu0
    %v908 = vpop.trf.xlu0
    %v909 = vpop.trf.xlu0
    %v910 = vpop.trf.xlu0
    %v911 = vpop.trf.xlu0
    %v912 = vpop.trf.xlu0
    %v913 = vpop.trf.xlu0
    %v914 = vpop.trf.xlu0
    %v915 = vpop.trf.xlu0
    %v917 = vsel %vm600, %v900, 0
    %919 = vmatprep.subr.mxu0 0.0
    %920 = vmatpush1.msra.mxu0 0.0
    %921 = vmatprep.subr.mxu0 0.0
    %922 = vmatpush1.msra.mxu0 0.0
    %923 = vmatprep.subr.mxu0 0.0
    %924 = vmatpush1.msra.mxu0 0.0
    %925 = vmatprep.subr.mxu0 0.0
    %926 = vmatpush1.msra.mxu0 0.0
    %927 = vmatprep.subr.mxu0 0.0
    %928 = vmatpush1.msra.mxu0 0.0
    %929 = vmatprep.subr.mxu0 0.0
    %930 = vmatpush1.msra.mxu0 0.0
    %931 = vmatprep.subr.mxu0 0.0
    %932 = vmatpush1.msra.mxu0 0.0
    %933 = vmatprep.subr.mxu0 0.0
    %934 = vmatpush1.msra.mxu0 0.0
    %935 = vmatprep.subr.mxu0 0.0
    %936 = vmatpush1.msra.mxu0 0.0
    %937 = vmatprep.subr.mxu0 0.0
    %938 = vmatpush1.msra.mxu0 0.0
    %939 = vmatprep.subr.mxu0 0.0
    %940 = vmatpush1.msra.mxu0 0.0
    %941 = vmatprep.subr.mxu0 0.0
    %942 = vmatpush1.msra.mxu0 0.0
    %943 = vmatprep.subr.mxu0 0.0
    %944 = vmatpush1.msra.mxu0 0.0
    %945 = vmatprep.subr.mxu0 0.0
    %946 = vmatpush1.msra.mxu0 0.0
    %947 = vmatprep.subr.mxu0 0.0
    %948 = vmatpush1.msra.mxu0 0.0
    %949 = vmatprep.subr.mxu0 0.0
    %950 = vmatpush1.msra.mxu0 %v32
    %951 = vmatprep.subr.mxu0 0.0
    %952 = vmatpush2.msra.mxu0 0.0
    %953 = vmatprep.subr.mxu0 0.0
    %954 = vmatpush2.msra.mxu0 0.0
    %955 = vmatprep.subr.mxu0 0.0
    %956 = vmatpush2.msra.mxu0 0.0
    %957 = vmatprep.subr.mxu0 0.0
    %958 = vmatpush2.msra.mxu0 0.0
    %959 = vmatprep.subr.mxu0 0.0
    %960 = vmatpush2.msra.mxu0 0.0
    %961 = vmatprep.subr.mxu0 0.0
    %962 = vmatpush2.msra.mxu0 0.0
    %963 = vmatprep.subr.mxu0 0.0
    %964 = vmatpush2.msra.mxu0 0.0
    %965 = vmatprep.subr.mxu0 0.0
    %966 = vmatpush2.msra.mxu0 0.0
    %967 = vmatprep.subr.mxu0 0.0
    %968 = vmatpush2.msra.mxu0 0.0
    %969 = vmatprep.subr.mxu0 0.0
    %970 = vmatpush2.msra.mxu0 0.0
    %971 = vmatprep.subr.mxu0 0.0
    %972 = vmatpush2.msra.mxu0 0.0
    %973 = vmatprep.subr.mxu0 0.0
    %974 = vmatpush2.msra.mxu0 0.0
    %975 = vmatprep.subr.mxu0 0.0
    %976 = vmatpush2.msra.mxu0 0.0
    %977 = vmatprep.subr.mxu0 0.0
    %978 = vmatpush2.msra.mxu0 0.0
    %979 = vmatprep.subr.mxu0 0.0
    %980 = vmatpush2.msra.mxu0 0.0
    %981 = vmatprep.subr.mxu0 0.0
    %982 = vmatpush2.msra.mxu0 0.0
    %983 = vmatprep.mubr.f32.mxu0 0.0
    %984 = vmatmul.mubr.f32.gmra.mxu0 %v917
    %v985 = vpop.f32.mrf.mxu0
    %v986 = vadd.f32 0.0, %v985
    %v987 = vpop.f32.mrf.mxu0
    %988 = vdwg.mxu0
    %989 = vxpose.xlu0.b32.start [1/16] %v564, 128
    %990 = vxpose.xlu0.b32.cont [2/16] 0.0, 128
    %991 = vxpose.xlu0.b32.cont [3/16] 0.0, 128
    %992 = vxpose.xlu0.b32.cont [4/16] 0.0, 128
    %993 = vxpose.xlu0.b32.cont [5/16] 0.0, 128
    %994 = vxpose.xlu0.b32.cont [6/16] 0.0, 128
    %995 = vxpose.xlu0.b32.cont [7/16] 0.0, 128
    %996 = vxpose.xlu0.b32.cont [8/16] 0.0, 128
    %997 = vxpose.xlu0.b32.cont [9/16] 0.0, 128
    %998 = vxpose.xlu0.b32.cont [10/16] 0.0, 128
    %999 = vxpose.xlu0.b32.cont [11/16] 0.0, 128
    %1000 = vxpose.xlu0.b32.cont [12/16] 0.0, 128
    %1001 = vxpose.xlu0.b32.cont [13/16] 0.0, 128
    %1002 = vxpose.xlu0.b32.cont [14/16] 0.0, 128
    %1003 = vxpose.xlu0.b32.cont [15/16] 0.0, 128
    %1004 = vxpose.xlu0.b32.end [16/16] 0.0, 128
    %v1005 = vpop.trf.xlu0
    %v1006 = vpop.trf.xlu0
    %v1007 = vpop.trf.xlu0
    %v1008 = vpop.trf.xlu0
    %v1009 = vpop.trf.xlu0
    %v1010 = vpop.trf.xlu0
    %v1011 = vpop.trf.xlu0
    %v1012 = vpop.trf.xlu0
    %v1013 = vpop.trf.xlu0
    %v1014 = vpop.trf.xlu0
    %v1015 = vpop.trf.xlu0
    %v1016 = vpop.trf.xlu0
    %v1017 = vpop.trf.xlu0
    %v1018 = vpop.trf.xlu0
    %v1019 = vpop.trf.xlu0
    %v1020 = vpop.trf.xlu0
    %v1022 = vsel %vm600, %v1005, 0
    %1024 = vmatprep.subr.mxu0 0.0
    %1025 = vmatpush1.msra.mxu0 0.0
    %1026 = vmatprep.subr.mxu0 0.0
    %1027 = vmatpush1.msra.mxu0 0.0
    %1028 = vmatprep.subr.mxu0 0.0
    %1029 = vmatpush1.msra.mxu0 0.0
    %1030 = vmatprep.subr.mxu0 0.0
    %1031 = vmatpush1.msra.mxu0 0.0
    %1032 = vmatprep.subr.mxu0 0.0
    %1033 = vmatpush1.msra.mxu0 0.0
    %1034 = vmatprep.subr.mxu0 0.0
    %1035 = vmatpush1.msra.mxu0 0.0
    %1036 = vmatprep.subr.mxu0 0.0
    %1037 = vmatpush1.msra.mxu0 0.0
    %1038 = vmatprep.subr.mxu0 0.0
    %1039 = vmatpush1.msra.mxu0 0.0
    %1040 = vmatprep.subr.mxu0 0.0
    %1041 = vmatpush1.msra.mxu0 0.0
    %1042 = vmatprep.subr.mxu0 0.0
    %1043 = vmatpush1.msra.mxu0 0.0
    %1044 = vmatprep.subr.mxu0 0.0
    %1045 = vmatpush1.msra.mxu0 0.0
    %1046 = vmatprep.subr.mxu0 0.0
    %1047 = vmatpush1.msra.mxu0 0.0
    %1048 = vmatprep.subr.mxu0 0.0
    %1049 = vmatpush1.msra.mxu0 0.0
    %1050 = vmatprep.subr.mxu0 0.0
    %1051 = vmatpush1.msra.mxu0 0.0
    %1052 = vmatprep.subr.mxu0 0.0
    %1053 = vmatpush1.msra.mxu0 0.0
    %1054 = vmatprep.subr.mxu0 0.0
    %1055 = vmatpush1.msra.mxu0 %v33
    %1056 = vmatprep.subr.mxu0 0.0
    %1057 = vmatpush2.msra.mxu0 0.0
    %1058 = vmatprep.subr.mxu0 0.0
    %1059 = vmatpush2.msra.mxu0 0.0
    %1060 = vmatprep.subr.mxu0 0.0
    %1061 = vmatpush2.msra.mxu0 0.0
    %1062 = vmatprep.subr.mxu0 0.0
    %1063 = vmatpush2.msra.mxu0 0.0
    %1064 = vmatprep.subr.mxu0 0.0
    %1065 = vmatpush2.msra.mxu0 0.0
    %1066 = vmatprep.subr.mxu0 0.0
    %1067 = vmatpush2.msra.mxu0 0.0
    %1068 = vmatprep.subr.mxu0 0.0
    %1069 = vmatpush2.msra.mxu0 0.0
    %1070 = vmatprep.subr.mxu0 0.0
    %1071 = vmatpush2.msra.mxu0 0.0
    %1072 = vmatprep.subr.mxu0 0.0
    %1073 = vmatpush2.msra.mxu0 0.0
    %1074 = vmatprep.subr.mxu0 0.0
    %1075 = vmatpush2.msra.mxu0 0.0
    %1076 = vmatprep.subr.mxu0 0.0
    %1077 = vmatpush2.msra.mxu0 0.0
    %1078 = vmatprep.subr.mxu0 0.0
    %1079 = vmatpush2.msra.mxu0 0.0
    %1080 = vmatprep.subr.mxu0 0.0
    %1081 = vmatpush2.msra.mxu0 0.0
    %1082 = vmatprep.subr.mxu0 0.0
    %1083 = vmatpush2.msra.mxu0 0.0
    %1084 = vmatprep.subr.mxu0 0.0
    %1085 = vmatpush2.msra.mxu0 0.0
    %1086 = vmatprep.subr.mxu0 0.0
    %1087 = vmatpush2.msra.mxu0 0.0
    %1088 = vmatprep.mubr.f32.mxu0 0.0
    %1089 = vmatmul.mubr.f32.gmra.mxu0 %v1022
    %v1090 = vpop.f32.mrf.mxu0
    %v1091 = vadd.f32 0.0, %v1090
    %v1092 = vpop.f32.mrf.mxu0
    %1093 = vdwg.mxu0
    %1094 = vxpose.xlu0.b32.start [1/16] %v565, 128
    %1095 = vxpose.xlu0.b32.cont [2/16] 0.0, 128
    %1096 = vxpose.xlu0.b32.cont [3/16] 0.0, 128
    %1097 = vxpose.xlu0.b32.cont [4/16] 0.0, 128
    %1098 = vxpose.xlu0.b32.cont [5/16] 0.0, 128
    %1099 = vxpose.xlu0.b32.cont [6/16] 0.0, 128
    %1100 = vxpose.xlu0.b32.cont [7/16] 0.0, 128
    %1101 = vxpose.xlu0.b32.cont [8/16] 0.0, 128
    %1102 = vxpose.xlu0.b32.cont [9/16] 0.0, 128
    %1103 = vxpose.xlu0.b32.cont [10/16] 0.0, 128
    %1104 = vxpose.xlu0.b32.cont [11/16] 0.0, 128
    %1105 = vxpose.xlu0.b32.cont [12/16] 0.0, 128
    %1106 = vxpose.xlu0.b32.cont [13/16] 0.0, 128
    %1107 = vxpose.xlu0.b32.cont [14/16] 0.0, 128
    %1108 = vxpose.xlu0.b32.cont [15/16] 0.0, 128
    %1109 = vxpose.xlu0.b32.end [16/16] 0.0, 128
    %v1110 = vpop.trf.xlu0
    %v1111 = vpop.trf.xlu0
    %v1112 = vpop.trf.xlu0
    %v1113 = vpop.trf.xlu0
    %v1114 = vpop.trf.xlu0
    %v1115 = vpop.trf.xlu0
    %v1116 = vpop.trf.xlu0
    %v1117 = vpop.trf.xlu0
    %v1118 = vpop.trf.xlu0
    %v1119 = vpop.trf.xlu0
    %v1120 = vpop.trf.xlu0
    %v1121 = vpop.trf.xlu0
    %v1122 = vpop.trf.xlu0
    %v1123 = vpop.trf.xlu0
    %v1124 = vpop.trf.xlu0
    %v1125 = vpop.trf.xlu0
    %v1127 = vsel %vm600, %v1110, 0
    %1129 = vmatprep.subr.mxu0 0.0
    %1130 = vmatpush1.msra.mxu0 0.0
    %1131 = vmatprep.subr.mxu0 0.0
    %1132 = vmatpush1.msra.mxu0 0.0
    %1133 = vmatprep.subr.mxu0 0.0
    %1134 = vmatpush1.msra.mxu0 0.0
    %1135 = vmatprep.subr.mxu0 0.0
    %1136 = vmatpush1.msra.mxu0 0.0
    %1137 = vmatprep.subr.mxu0 0.0
    %1138 = vmatpush1.msra.mxu0 0.0
    %1139 = vmatprep.subr.mxu0 0.0
    %1140 = vmatpush1.msra.mxu0 0.0
    %1141 = vmatprep.subr.mxu0 0.0
    %1142 = vmatpush1.msra.mxu0 0.0
    %1143 = vmatprep.subr.mxu0 0.0
    %1144 = vmatpush1.msra.mxu0 0.0
    %1145 = vmatprep.subr.mxu0 0.0
    %1146 = vmatpush1.msra.mxu0 0.0
    %1147 = vmatprep.subr.mxu0 0.0
    %1148 = vmatpush1.msra.mxu0 0.0
    %1149 = vmatprep.subr.mxu0 0.0
    %1150 = vmatpush1.msra.mxu0 0.0
    %1151 = vmatprep.subr.mxu0 0.0
    %1152 = vmatpush1.msra.mxu0 0.0
    %1153 = vmatprep.subr.mxu0 0.0
    %1154 = vmatpush1.msra.mxu0 0.0
    %1155 = vmatprep.subr.mxu0 0.0
    %1156 = vmatpush1.msra.mxu0 0.0
    %1157 = vmatprep.subr.mxu0 0.0
    %1158 = vmatpush1.msra.mxu0 0.0
    %1159 = vmatprep.subr.mxu0 0.0
    %1160 = vmatpush1.msra.mxu0 %v34
    %1161 = vmatprep.subr.mxu0 0.0
    %1162 = vmatpush2.msra.mxu0 0.0
    %1163 = vmatprep.subr.mxu0 0.0
    %1164 = vmatpush2.msra.mxu0 0.0
    %1165 = vmatprep.subr.mxu0 0.0
    %1166 = vmatpush2.msra.mxu0 0.0
    %1167 = vmatprep.subr.mxu0 0.0
    %1168 = vmatpush2.msra.mxu0 0.0
    %1169 = vmatprep.subr.mxu0 0.0
    %1170 = vmatpush2.msra.mxu0 0.0
    %1171 = vmatprep.subr.mxu0 0.0
    %1172 = vmatpush2.msra.mxu0 0.0
    %1173 = vmatprep.subr.mxu0 0.0
    %1174 = vmatpush2.msra.mxu0 0.0
    %1175 = vmatprep.subr.mxu0 0.0
    %1176 = vmatpush2.msra.mxu0 0.0
    %1177 = vmatprep.subr.mxu0 0.0
    %1178 = vmatpush2.msra.mxu0 0.0
    %1179 = vmatprep.subr.mxu0 0.0
    %1180 = vmatpush2.msra.mxu0 0.0
    %1181 = vmatprep.subr.mxu0 0.0
    %1182 = vmatpush2.msra.mxu0 0.0
    %1183 = vmatprep.subr.mxu0 0.0
    %1184 = vmatpush2.msra.mxu0 0.0
    %1185 = vmatprep.subr.mxu0 0.0
    %1186 = vmatpush2.msra.mxu0 0.0
    %1187 = vmatprep.subr.mxu0 0.0
    %1188 = vmatpush2.msra.mxu0 0.0
    %1189 = vmatprep.subr.mxu0 0.0
    %1190 = vmatpush2.msra.mxu0 0.0
    %1191 = vmatprep.subr.mxu0 0.0
    %1192 = vmatpush2.msra.mxu0 0.0
    %1193 = vmatprep.mubr.f32.mxu0 0.0
    %1194 = vmatmul.mubr.f32.gmra.mxu0 %v1127
    %v1195 = vpop.f32.mrf.mxu0
    %v1196 = vadd.f32 0.0, %v1195
    %v1197 = vpop.f32.mrf.mxu0
    %1198 = vdwg.mxu0
    %1199 = vxpose.xlu0.b32.start [1/16] %v566, 128
    %1200 = vxpose.xlu0.b32.cont [2/16] 0.0, 128
    %1201 = vxpose.xlu0.b32.cont [3/16] 0.0, 128
    %1202 = vxpose.xlu0.b32.cont [4/16] 0.0, 128
    %1203 = vxpose.xlu0.b32.cont [5/16] 0.0, 128
    %1204 = vxpose.xlu0.b32.cont [6/16] 0.0, 128
    %1205 = vxpose.xlu0.b32.cont [7/16] 0.0, 128
    %1206 = vxpose.xlu0.b32.cont [8/16] 0.0, 128
    %1207 = vxpose.xlu0.b32.cont [9/16] 0.0, 128
    %1208 = vxpose.xlu0.b32.cont [10/16] 0.0, 128
    %1209 = vxpose.xlu0.b32.cont [11/16] 0.0, 128
    %1210 = vxpose.xlu0.b32.cont [12/16] 0.0, 128
    %1211 = vxpose.xlu0.b32.cont [13/16] 0.0, 128
    %1212 = vxpose.xlu0.b32.cont [14/16] 0.0, 128
    %1213 = vxpose.xlu0.b32.cont [15/16] 0.0, 128
    %1214 = vxpose.xlu0.b32.end [16/16] 0.0, 128
    %v1215 = vpop.trf.xlu0
    %v1216 = vpop.trf.xlu0
    %v1217 = vpop.trf.xlu0
    %v1218 = vpop.trf.xlu0
    %v1219 = vpop.trf.xlu0
    %v1220 = vpop.trf.xlu0
    %v1221 = vpop.trf.xlu0
    %v1222 = vpop.trf.xlu0
    %v1223 = vpop.trf.xlu0
    %v1224 = vpop.trf.xlu0
    %v1225 = vpop.trf.xlu0
    %v1226 = vpop.trf.xlu0
    %v1227 = vpop.trf.xlu0
    %v1228 = vpop.trf.xlu0
    %v1229 = vpop.trf.xlu0
    %v1230 = vpop.trf.xlu0
    %v1232 = vsel %vm600, %v1215, 0
    %1234 = vmatprep.subr.mxu0 0.0
    %1235 = vmatpush1.msra.mxu0 0.0
    %1236 = vmatprep.subr.mxu0 0.0
    %1237 = vmatpush1.msra.mxu0 0.0
    %1238 = vmatprep.subr.mxu0 0.0
    %1239 = vmatpush1.msra.mxu0 0.0
    %1240 = vmatprep.subr.mxu0 0.0
    %1241 = vmatpush1.msra.mxu0 0.0
    %1242 = vmatprep.subr.mxu0 0.0
    %1243 = vmatpush1.msra.mxu0 0.0
    %1244 = vmatprep.subr.mxu0 0.0
    %1245 = vmatpush1.msra.mxu0 0.0
    %1246 = vmatprep.subr.mxu0 0.0
    %1247 = vmatpush1.msra.mxu0 0.0
    %1248 = vmatprep.subr.mxu0 0.0
    %1249 = vmatpush1.msra.mxu0 0.0
    %1250 = vmatprep.subr.mxu0 0.0
    %1251 = vmatpush1.msra.mxu0 0.0
    %1252 = vmatprep.subr.mxu0 0.0
    %1253 = vmatpush1.msra.mxu0 0.0
    %1254 = vmatprep.subr.mxu0 0.0
    %1255 = vmatpush1.msra.mxu0 0.0
    %1256 = vmatprep.subr.mxu0 0.0
    %1257 = vmatpush1.msra.mxu0 0.0
    %1258 = vmatprep.subr.mxu0 0.0
    %1259 = vmatpush1.msra.mxu0 0.0
    %1260 = vmatprep.subr.mxu0 0.0
    %1261 = vmatpush1.msra.mxu0 0.0
    %1262 = vmatprep.subr.mxu0 0.0
    %1263 = vmatpush1.msra.mxu0 0.0
    %1264 = vmatprep.subr.mxu0 0.0
    %1265 = vmatpush1.msra.mxu0 %v35
    %1266 = vmatprep.subr.mxu0 0.0
    %1267 = vmatpush2.msra.mxu0 0.0
    %1268 = vmatprep.subr.mxu0 0.0
    %1269 = vmatpush2.msra.mxu0 0.0
    %1270 = vmatprep.subr.mxu0 0.0
    %1271 = vmatpush2.msra.mxu0 0.0
    %1272 = vmatprep.subr.mxu0 0.0
    %1273 = vmatpush2.msra.mxu0 0.0
    %1274 = vmatprep.subr.mxu0 0.0
    %1275 = vmatpush2.msra.mxu0 0.0
    %1276 = vmatprep.subr.mxu0 0.0
    %1277 = vmatpush2.msra.mxu0 0.0
    %1278 = vmatprep.subr.mxu0 0.0
    %1279 = vmatpush2.msra.mxu0 0.0
    %1280 = vmatprep.subr.mxu0 0.0
    %1281 = vmatpush2.msra.mxu0 0.0
    %1282 = vmatprep.subr.mxu0 0.0
    %1283 = vmatpush2.msra.mxu0 0.0
    %1284 = vmatprep.subr.mxu0 0.0
    %1285 = vmatpush2.msra.mxu0 0.0
    %1286 = vmatprep.subr.mxu0 0.0
    %1287 = vmatpush2.msra.mxu0 0.0
    %1288 = vmatprep.subr.mxu0 0.0
    %1289 = vmatpush2.msra.mxu0 0.0
    %1290 = vmatprep.subr.mxu0 0.0
    %1291 = vmatpush2.msra.mxu0 0.0
    %1292 = vmatprep.subr.mxu0 0.0
    %1293 = vmatpush2.msra.mxu0 0.0
    %1294 = vmatprep.subr.mxu0 0.0
    %1295 = vmatpush2.msra.mxu0 0.0
    %1296 = vmatprep.subr.mxu0 0.0
    %1297 = vmatpush2.msra.mxu0 0.0
    %1298 = vmatprep.mubr.f32.mxu0 0.0
    %1299 = vmatmul.mubr.f32.gmra.mxu0 %v1232
    %v1300 = vpop.f32.mrf.mxu0
    %v1301 = vadd.f32 0.0, %v1300
    %v1302 = vpop.f32.mrf.mxu0
    %1303 = vdwg.mxu0
    %1304 = vxpose.xlu0.b32.start [1/16] %v567, 128
    %1305 = vxpose.xlu0.b32.cont [2/16] 0.0, 128
    %1306 = vxpose.xlu0.b32.cont [3/16] 0.0, 128
    %1307 = vxpose.xlu0.b32.cont [4/16] 0.0, 128
    %1308 = vxpose.xlu0.b32.cont [5/16] 0.0, 128
    %1309 = vxpose.xlu0.b32.cont [6/16] 0.0, 128
    %1310 = vxpose.xlu0.b32.cont [7/16] 0.0, 128
    %1311 = vxpose.xlu0.b32.cont [8/16] 0.0, 128
    %1312 = vxpose.xlu0.b32.cont [9/16] 0.0, 128
    %1313 = vxpose.xlu0.b32.cont [10/16] 0.0, 128
    %1314 = vxpose.xlu0.b32.cont [11/16] 0.0, 128
    %1315 = vxpose.xlu0.b32.cont [12/16] 0.0, 128
    %1316 = vxpose.xlu0.b32.cont [13/16] 0.0, 128
    %1317 = vxpose.xlu0.b32.cont [14/16] 0.0, 128
    %1318 = vxpose.xlu0.b32.cont [15/16] 0.0, 128
    %1319 = vxpose.xlu0.b32.end [16/16] 0.0, 128
    %v1320 = vpop.trf.xlu0
    %v1321 = vpop.trf.xlu0
    %v1322 = vpop.trf.xlu0
    %v1323 = vpop.trf.xlu0
    %v1324 = vpop.trf.xlu0
    %v1325 = vpop.trf.xlu0
    %v1326 = vpop.trf.xlu0
    %v1327 = vpop.trf.xlu0
    %v1328 = vpop.trf.xlu0
    %v1329 = vpop.trf.xlu0
    %v1330 = vpop.trf.xlu0
    %v1331 = vpop.trf.xlu0
    %v1332 = vpop.trf.xlu0
    %v1333 = vpop.trf.xlu0
    %v1334 = vpop.trf.xlu0
    %v1335 = vpop.trf.xlu0
    %v1337 = vsel %vm600, %v1320, 0
    %1339 = vmatprep.subr.mxu0 0.0
    %1340 = vmatpush1.msra.mxu0 0.0
    %1341 = vmatprep.subr.mxu0 0.0
    %1342 = vmatpush1.msra.mxu0 0.0
    %1343 = vmatprep.subr.mxu0 0.0
    %1344 = vmatpush1.msra.mxu0 0.0
    %1345 = vmatprep.subr.mxu0 0.0
    %1346 = vmatpush1.msra.mxu0 0.0
    %1347 = vmatprep.subr.mxu0 0.0
    %1348 = vmatpush1.msra.mxu0 0.0
    %1349 = vmatprep.subr.mxu0 0.0
    %1350 = vmatpush1.msra.mxu0 0.0
    %1351 = vmatprep.subr.mxu0 0.0
    %1352 = vmatpush1.msra.mxu0 0.0
    %1353 = vmatprep.subr.mxu0 0.0
    %1354 = vmatpush1.msra.mxu0 0.0
    %1355 = vmatprep.subr.mxu0 0.0
    %1356 = vmatpush1.msra.mxu0 0.0
    %1357 = vmatprep.subr.mxu0 0.0
    %1358 = vmatpush1.msra.mxu0 0.0
    %1359 = vmatprep.subr.mxu0 0.0
    %1360 = vmatpush1.msra.mxu0 0.0
    %1361 = vmatprep.subr.mxu0 0.0
    %1362 = vmatpush1.msra.mxu0 0.0
    %1363 = vmatprep.subr.mxu0 0.0
    %1364 = vmatpush1.msra.mxu0 0.0
    %1365 = vmatprep.subr.mxu0 0.0
    %1366 = vmatpush1.msra.mxu0 0.0
    %1367 = vmatprep.subr.mxu0 0.0
    %1368 = vmatpush1.msra.mxu0 0.0
    %1369 = vmatprep.subr.mxu0 0.0
    %1370 = vmatpush1.msra.mxu0 %v36
    %1371 = vmatprep.subr.mxu0 0.0
    %1372 = vmatpush2.msra.mxu0 0.0
    %1373 = vmatprep.subr.mxu0 0.0
    %1374 = vmatpush2.msra.mxu0 0.0
    %1375 = vmatprep.subr.mxu0 0.0
    %1376 = vmatpush2.msra.mxu0 0.0
    %1377 = vmatprep.subr.mxu0 0.0
    %1378 = vmatpush2.msra.mxu0 0.0
    %1379 = vmatprep.subr.mxu0 0.0
    %1380 = vmatpush2.msra.mxu0 0.0
    %1381 = vmatprep.subr.mxu0 0.0
    %1382 = vmatpush2.msra.mxu0 0.0
    %1383 = vmatprep.subr.mxu0 0.0
    %1384 = vmatpush2.msra.mxu0 0.0
    %1385 = vmatprep.subr.mxu0 0.0
    %1386 = vmatpush2.msra.mxu0 0.0
    %1387 = vmatprep.subr.mxu0 0.0
    %1388 = vmatpush2.msra.mxu0 0.0
    %1389 = vmatprep.subr.mxu0 0.0
    %1390 = vmatpush2.msra.mxu0 0.0
    %1391 = vmatprep.subr.mxu0 0.0
    %1392 = vmatpush2.msra.mxu0 0.0
    %1393 = vmatprep.subr.mxu0 0.0
    %1394 = vmatpush2.msra.mxu0 0.0
    %1395 = vmatprep.subr.mxu0 0.0
    %1396 = vmatpush2.msra.mxu0 0.0
    %1397 = vmatprep.subr.mxu0 0.0
    %1398 = vmatpush2.msra.mxu0 0.0
    %1399 = vmatprep.subr.mxu0 0.0
    %1400 = vmatpush2.msra.mxu0 0.0
    %1401 = vmatprep.subr.mxu0 0.0
    %1402 = vmatpush2.msra.mxu0 0.0
    %1403 = vmatprep.mubr.f32.mxu0 0.0
    %1404 = vmatmul.mubr.f32.gmra.mxu0 %v1337
    %v1405 = vpop.f32.mrf.mxu0
    %v1406 = vadd.f32 0.0, %v1405
    %v1407 = vpop.f32.mrf.mxu0
    %1408 = vdwg.mxu0
    %vm1417 = vcmask 1041409
    %v1418 = vsel %vm1417, %v95, %v94
    %vm1419 = vcmask 1042434
    %v1420 = vsel %vm1419, %v96, %v1418
    %vm1421 = vcmask 1043459
    %v1422 = vsel %vm1421, %v97, %v1420
    %vm1423 = vcmask 1044484
    %v1424 = vsel %vm1423, %v98, %v1422
    %vm1425 = vcmask 1045509
    %v1426 = vsel %vm1425, %v99, %v1424
    %vm1427 = vcmask 1046534
    %v1428 = vsel %vm1427, %v100, %v1426
    %vm1429 = vcmask 1047559
    %v1430 = vsel %vm1429, %v101, %v1428
    %1432 = vst.msk [vmem:[#allocation5] sm:$0xff] %vm37, %v1430
    %v1441 = vsel %vm1417, %v115, %v108
    %v1442 = vsel %vm1419, %v122, %v1441
    %v1443 = vsel %vm1421, %v129, %v1442
    %v1444 = vsel %vm1423, %v136, %v1443
    %v1445 = vsel %vm1425, %v143, %v1444
    %v1446 = vsel %vm1427, %v150, %v1445
    %v1447 = vsel %vm1429, %v157, %v1446
    %1448 = vrot.lane.b32.xlu0 %v1447, 32
    %v1449 = vpop.permute.xlu0 %1448
    %vm1451 = vcmask 523520
    %1452 = vst.msk [vmem:[#allocation5] sm:$0xff] %vm1451, %v1449
    %v1461 = vrot.slane %v776, 7
    %v1462 = vsel %vm1417, %v1461, %v671
    %v1463 = vrot.slane %v881, 6
    %v1464 = vsel %vm1419, %v1463, %v1462
    %v1465 = vrot.slane %v986, 5
    %v1466 = vsel %vm1421, %v1465, %v1464
    %v1467 = vrot.slane %v1091, 4
    %v1468 = vsel %vm1423, %v1467, %v1466
    %v1469 = vrot.slane %v1196, 3
    %v1470 = vsel %vm1425, %v1469, %v1468
    %v1471 = vrot.slane %v1301, 2
    %v1472 = vsel %vm1427, %v1471, %v1470
    %v1473 = vrot.slane %v1406, 1
    %v1474 = vsel %vm1429, %v1473, %v1472
    %1475 = vrot.lane.b32.xlu0 %v1474, 64
    %v1476 = vpop.permute.xlu0 %1475
    %vm1478 = vcmask 785920
    %1479 = vst.msk [vmem:[#allocation5] sm:$0xff] %vm1478, %v1476
    // Predicated region
    $region18: #{tpu_custom_call.1} parent=1 // pred_check
      _
    $region19: #{tpu_custom_call.1} parent=1 // pred_check_branch
      %1481 = sbr.rel (0) target = $region21
    $region20: #{tpu_custom_call.1} parent=1 // pred_region
      %s1483 = ssub.s32 128, 128
      %1484 = vsyncadd [#allocation4], %s1483
      %s1486 = sshll.u32 [#allocation5], 4
      %s1487 = int_to_ptr.vmem [resolvable:$true] %s1486
      %1489 = dma.vmem_to_hbm [thread:$0]  %s1487, 128, %s3, [#allocation4]
    $region21: #{tpu_custom_call.1} parent=1 // pred_fallthru
      _
    // Predicated region
    $region22: #{tpu_custom_call.1} parent=1 // pred_check
      _
    $region23: #{tpu_custom_call.1} parent=1 // pred_check_branch
      %1491 = sbr.rel (0) target = $region25
    $region24: #{tpu_custom_call.1} parent=1 // pred_region
      %1492 = dma.done [#allocation4], 128
    $region25: #{tpu_custom_call.1} parent=1 // pred_fallthru
      _
    %1493 = vsyncpa [#allocation3], 1
    %1494 = vsyncpa [#allocation4], 1

</llo_original>
